<compile_context>
chip_gen: v7x
topology: tpu7x:2x2x1
jax: 0.10.0
libtpu: 0.0.40
codegen_flags: <defaults>
</compile_context>

<pallas_src>
import functools
import sys

import jax
import jax.numpy as jnp
from jax.experimental import pallas as pl
from jax.experimental.pallas import tpu as pltpu

# The kernel bakes in the h == 0 simplification above; it is only valid while
# the module-level flag in the PyTorch source stays 0.
DIFFERENT_H_STATES_RECURRENT_UPDATE_MECHANISM = 0


def _silu(x):
    return x * (1.0 / (1.0 + jnp.exp(-x)))


def _softplus(x):
    # numerically stable softplus built only from exp/log (Mosaic-supported)
    return jnp.maximum(x, 0.0) + jnp.log(1.0 + jnp.exp(-jnp.abs(x)))


# ----------------------------------------------------------------------------
# pltpu.roll shift-convention probe (run once, compiled, tiny).
# "jnp"      : pltpu.roll(x, s, a) == jnp.roll(x, s, a)
# "reversed" : opposite shift direction
# "off"      : roll unavailable / not lowerable -> use concatenate shifts
# ----------------------------------------------------------------------------
_ROLL_SEMANTICS = None


def _probe_roll_semantics():
    global _ROLL_SEMANTICS
    if _ROLL_SEMANTICS is not None:
        return _ROLL_SEMANTICS
    mode = "off"
    if hasattr(pltpu, "roll"):
        try:
            def k(x_ref, o_ref):
                o_ref[...] = pltpu.roll(x_ref[...], shift=1, axis=1)

            x = jnp.arange(8 * 128, dtype=jnp.float32).reshape(8, 128)
            y = pl.pallas_call(
                k, out_shape=jax.ShapeDtypeStruct((8, 128), jnp.float32))(x)
            if bool(jnp.array_equal(y, jnp.roll(x, 1, axis=1))):
                mode = "jnp"
            elif bool(jnp.array_equal(y, jnp.roll(x, -1, axis=1))):
                mode = "reversed"
        except Exception:
            mode = "off"
    _ROLL_SEMANTICS = mode
    return mode


# ----------------------------------------------------------------------------
# Kernel
# ----------------------------------------------------------------------------
def mamba_block_kernel(x_ref, w_xp_ref, b_xp_ref, w_conv_ref, bc_ref,
                       w_cl_ref, b_cl_ref, w_s6_ref, b_s6_ref,
                       w_out_ref, b_out_ref, o_ref, *, roll_mode):
    bb, L, D = x_ref.shape                 # batches per grid step, seq, d_model
    D2 = w_cl_ref.shape[0]                 # 2 * d_model
    N = (w_s6_ref.shape[1] - D2) // 2      # state_size
    Dp = o_ref.shape[2]                    # lane-padded output width
    mm = w_xp_ref.dtype                    # matmul operand dtype (bf16)

    x = x_ref[...].reshape(bb * L, D).astype(mm)

    # ---- fused inp_proj | D residual projection : one (bb*L, D)x(D, 4D) ----
    xp_all = (jnp.dot(x, w_xp_ref[...], preferred_element_type=jnp.float32)
              + b_xp_ref[...])                               # (bb*L, 2*D2)
    x_proj = xp_all[:, :D2]
    # Early silu + bf16 down-cast so the f32 residual half dies before the conv.
    x_res = _silu(xp_all[:, D2:]).astype(mm)                 # (bb*L, D2)

    # ---- Conv1d(seq_len, seq_len, k=3, pad=1) over the feature axis ----
    # All bb batches stacked on the matmul N axis -> one (3L, L)@(L, bb*D2)
    # matmul; the +/-1 feature shifts are applied to the OUTPUT row-blocks.
    nW = bb * D2
    x_stack = jnp.transpose(x_proj.reshape(bb, L, D2),
                            (1, 0, 2)).reshape(L, nW)
    r = jnp.dot(w_conv_ref[...], x_stack.astype(mm),
                preferred_element_type=jnp.float32)          # (3L, bb*D2)
    r0 = r[0:L]          # tap k=0 -> pairs with feature f-1
    r1 = r[L:2 * L]      # tap k=1 -> feature f
    r2 = r[2 * L:3 * L]  # tap k=2 -> pairs with feature f+1

    use_roll = (roll_mode in ("jnp", "reversed")) and (nW % 128 == 0)
    if use_roll:
        if roll_mode == "jnp":
            s_r = pltpu.roll(r0, shift=1, axis=1)       # -> r0[:, f-1] (wraps)
            s_l = pltpu.roll(r2, shift=nW - 1, axis=1)  # -> r2[:, f+1] (wraps)
        else:  # reversed convention
            s_r = pltpu.roll(r0, shift=nW - 1, axis=1)
            s_l = pltpu.roll(r2, shift=1, axis=1)
    else:
        # TODO(synk): pad D2 to a multiple of 128 at production sizes so the
        # XLU roll path (no slab materialization) is always taken.
        zcol = jnp.zeros((L, 1), jnp.float32)
        s_r = jnp.concatenate([zcol, r0[:, :-1]], axis=1)
        s_l = jnp.concatenate([r2[:, 1:], zcol], axis=1)

    # Zero the wrapped / cross-batch boundary columns (one VPU select each).
    col = jax.lax.broadcasted_iota(jnp.int32, (L, nW), 1) % D2
    x_conv = (jnp.where(col == 0, 0.0, s_r) + r1
              + jnp.where(col == D2 - 1, 0.0, s_l) + bc_ref[...])

    x_conv_act = jnp.transpose(_silu(x_conv).reshape(L, bb, D2),
                               (1, 0, 2)).reshape(bb * L, D2).astype(mm)

    # ---- conv_linear : Linear(2D -> 2D) ----
    u = (jnp.dot(x_conv_act, w_cl_ref[...],
                 preferred_element_type=jnp.float32)
         + b_cl_ref[...])                                    # (bb*L, D2)

    # ---- S6 : fc1|fc2|fc3 fused into one (2D, 2D+2N) matmul ----
    s6 = (jnp.dot(u.astype(mm), w_s6_ref[...],
                  preferred_element_type=jnp.float32)
          + b_s6_ref[...])                                   # (bb*L, D2+2N)
    delta = _softplus(s6[:, :D2])
    bc_dot = jnp.sum(s6[:, D2:D2 + N] * s6[:, D2 + N:],
                     axis=-1, keepdims=True)                 # (bb*L, 1)
    # h starts at zero every forward -> recurrence and dA drop out:
    x_ssm = u * delta * bc_dot
    # TODO(synk): on v6e/v7x the elementwise chain above could run in bf16
    # (bf16 VPU/EUP); kept f32 so the same kernel is correct on v5e.

    x_comb = (_silu(x_ssm) * x_res).astype(mm)               # (bb*L, D2)

    # ---- out_proj : Linear(2D -> D), weight zero-padded to Dp lanes ----
    out = (jnp.dot(x_comb, w_out_ref[...],
                   preferred_element_type=jnp.float32)
           + b_out_ref[...])                                 # (bb*L, Dp)

    o_ref[...] = out.reshape(bb, L, Dp).astype(o_ref.dtype)


# ----------------------------------------------------------------------------
# Wrapper-side helpers
# ----------------------------------------------------------------------------
def _vmem_budget_bytes():
    """Generation-aware VMEM request: ~7/8 of capacity, never above 100 MiB.
    v7x (64 MiB)  -> ~56 MiB;  v5e/v6e (128 MiB) -> 100 MiB."""
    cap = 128 << 20
    try:
        info = pltpu.get_tpu_info()
        cap = int(getattr(info, "vmem_capacity_bytes", 0)) or cap
    except Exception:
        pass
    return min(cap - cap // 8, 100 << 20)


def _pick_block_b(B, L, fits):
    """Pick batches-per-step so M = bb*L feeds the MXU well and grid >= 2."""
    divisors = [d for d in range(1, B + 1) if B % d == 0]
    feasible = [d for d in divisors if fits(d)] or [1]

    def score(bb):
        m = bb * L
        return (
            (B // bb) >= 2,    # >= 2 grid steps: v7x megacore + DMA pipelining
            m % 256 == 0,      # fill 256-wide MXU rows (v6e/v7x)
            m % 128 == 0,      # fill 128-wide MXU rows (v5e)
            m >= 256,
            bb,                # then: as much M per step as fits VMEM
        )

    return max(feasible, key=score)


def _build_call(B, L, D, Dp, bb, weights, out_dtype, vmem_limit,
                single_buffer, roll_mode):
    def _wspec(shape):
        nd = len(shape)
        imap = lambda b, _n=nd: (0,) * _n
        if single_buffer:
            # Constant weight blocks never change across the batch grid.
            return pl.BlockSpec(shape, imap, pipeline_mode=pl.Buffered(1))
        return pl.BlockSpec(shape, imap)

    in_specs = [pl.BlockSpec((bb, L, D), lambda b: (b, 0, 0))]
    in_specs += [_wspec(w.shape) for w in weights]
    out_specs = pl.BlockSpec((bb, L, Dp), lambda b: (b, 0, 0))

    return pl.pallas_call(
        functools.partial(mamba_block_kernel, roll_mode=roll_mode),
        out_shape=jax.ShapeDtypeStruct((B, L, Dp), out_dtype),
        grid=(B // bb,),
        in_specs=in_specs,
        out_specs=out_specs,
        compiler_params=pltpu.CompilerParams(
            dimension_semantics=("parallel",),
            vmem_limit_bytes=int(vmem_limit),
        ),
    )


def mamba_block(x, params, *, block_b=None, matmul_dtype=jnp.bfloat16):
    assert DIFFERENT_H_STATES_RECURRENT_UPDATE_MECHANISM == 0, (
        "kernel assumes the S6 hidden state is zero-initialised every forward")
    B, L, D = x.shape
    D2 = 2 * D
    f32 = jnp.float32

    # ---- wrapper-side weight fusion (one-time layout prep) ----
    w_xp = jnp.concatenate([params["w_inp"], params["w_d"]], axis=1).astype(matmul_dtype)
    b_xp = jnp.concatenate([params["b_inp"], params["b_d"]], axis=1).astype(f32)
    w_conv = jnp.concatenate([params["wc0"], params["wc1"], params["wc2"]],
                             axis=0).astype(matmul_dtype)            # (3L, L)
    bc = params["bc"].astype(f32)
    w_cl = params["w_cl"].astype(matmul_dtype)
    b_cl = params["b_cl"].astype(f32)
    w_s6 = jnp.concatenate([params["w_fc1"], params["w_fc2"], params["w_fc3"]],
                           axis=1).astype(matmul_dtype)              # (2D, 2D+2N)
    b_s6 = jnp.concatenate([params["b_fc1"], params["b_fc2"], params["b_fc3"]],
                           axis=1).astype(f32)
    # Lane-dense output: zero-pad out_proj to a multiple of 128 output lanes.
    Dp = ((D + 127) // 128) * 128
    w_out = params["w_out"]
    b_out = params["b_out"]
    if Dp != D:
        w_out = jnp.concatenate([w_out, jnp.zeros((D2, Dp - D), w_out.dtype)], axis=1)
        b_out = jnp.concatenate([b_out, jnp.zeros((1, Dp - D), b_out.dtype)], axis=1)
    w_out = w_out.astype(matmul_dtype)
    b_out = b_out.astype(f32)
    # TODO(synk): v7x: store the large square weights in fp8 (e4m3) - MXU-native
    # there and halves resident VMEM; v5e/v6e: int8 weights with per-channel
    # scales folded into the bias epilogue (~2x MXU throughput).

    weights = (w_xp, b_xp, w_conv, bc, w_cl, b_cl, w_s6, b_s6, w_out, b_out)
    N_state = params["w_fc2"].shape[1]

    # ---- VMEM-aware choice of batches-per-grid-step ----
    budget = _vmem_budget_bytes()
    weight_bytes = sum(int(w.size) * w.dtype.itemsize for w in weights)

    def _est_vmem(bb, weight_mult=2):
        rows = bb * L
        acts = 18 * rows * D2 * 4 + 2 * rows * (D2 + 2 * N_state) * 4
        io = 2 * rows * (D * x.dtype.itemsize + Dp * 4)
        return weight_mult * weight_bytes + acts + io + (4 << 20)

    if block_b is None:
        bb = _pick_block_b(B, L, lambda d: _est_vmem(d) <= budget)
    else:
        bb = int(block_b)
        assert B % bb == 0, "block_b must divide the batch"

    vmem_limit = min(budget, max(_est_vmem(bb), 32 << 20))
    # TODO(synk): for production D where weights cannot stay VMEM-resident,
    # add a trailing "arbitrary" grid axis over the D2 contraction with a f32
    # accumulator + pl.when finalize instead of shrinking bb.
    # TODO(synk): pad L to a multiple of 8 and D/D2/N to multiples of 128 at
    # production sizes so all reshapes / lane slices stay (8,128)-tile aligned.

    roll_mode = _probe_roll_semantics()

    def _run(single_buffer):
        call = _build_call(B, L, D, Dp, bb, weights, x.dtype, vmem_limit,
                           single_buffer, roll_mode)
        return call(x, *weights)

    if hasattr(pl, "Buffered"):
        try:
            out = _run(True)
        except Exception as e:
            msg = str(e).lower()
            known = any(k in msg for k in
                        ("pipeline_mode", "pipeline mode", "buffered",
                         "buffer_count"))
            if not known:
                print("WARNING: single-buffered weight blocks failed "
                      f"({type(e).__name__}: {e}); retrying double-buffered.",
                      file=sys.stderr)
            # The VMEM budget above already assumed 2x weight footprint, so the
            # retry does not change the plan; genuine errors re-raise here.
            out = _run(False)
    else:
        out = _run(False)

    return out[..., :D] if Dp != D else out


# ----------------------------------------------------------------------------
# Pure-JAX reference (module semantics) and parameter init
# ----------------------------------------------------------------------------
def mamba_block_reference(x, p):
    x_proj = jnp.einsum("bld,de->ble", x, p["w_inp"]) + p["b_inp"][0]
    B_, L, F2 = x_proj.shape
    xp_pad = jnp.pad(x_proj, ((0, 0), (0, 0), (1, 1)))
    x_conv = (jnp.einsum("oc,bcf->bof", p["wc0"], xp_pad[:, :, 0:F2])
              + jnp.einsum("oc,bcf->bof", p["wc1"], xp_pad[:, :, 1:F2 + 1])
              + jnp.einsum("oc,bcf->bof", p["wc2"], xp_pad[:, :, 2:F2 + 2])
              + p["bc"][None, :, :])
    x_conv_act = _silu(x_conv)
    u = jnp.einsum("ble,ef->blf", x_conv_act, p["w_cl"]) + p["b_cl"][0]
    Bm = jnp.einsum("ble,en->bln", u, p["w_fc2"]) + p["b_fc2"][0]
    Cm = jnp.einsum("ble,en->bln", u, p["w_fc3"]) + p["b_fc3"][0]
    delta = _softplus(jnp.einsum("ble,ef->blf", u, p["w_fc1"]) + p["b_fc1"][0])
    x_ssm = u * delta * jnp.sum(Bm * Cm, axis=-1, keepdims=True)
    x_act = _silu(x_ssm)
    x_res = _silu(jnp.einsum("bld,de->ble", x, p["w_d"]) + p["b_d"][0])
    return jnp.einsum("ble,ed->bld", x_act * x_res, p["w_out"]) + p["b_out"][0]


def init_params(key, seq_len, d_model, state_size):
    D, D2, N, L = d_model, 2 * d_model, state_size, seq_len
    ks = jax.random.split(key, 18)

    def rnd(k, shape, scale=0.1):
        return (scale * jax.random.normal(k, shape)).astype(jnp.float32)

    return {
        # inp_proj: Linear(D, 2D)            (stored as (in, out))
        "w_inp": rnd(ks[0], (D, D2)), "b_inp": rnd(ks[1], (1, D2)),
        # conv: Conv1d(L, L, 3, padding=1)   (split into the 3 taps)
        "wc0": rnd(ks[2], (L, L)), "wc1": rnd(ks[3], (L, L)),
        "wc2": rnd(ks[4], (L, L)), "bc": rnd(ks[5], (L, 1)),
        # conv_linear: Linear(2D, 2D)
        "w_cl": rnd(ks[6], (D2, D2)), "b_cl": rnd(ks[7], (1, D2)),
        # S6.fc1/fc2/fc3
        "w_fc1": rnd(ks[8], (D2, D2)), "b_fc1": rnd(ks[9], (1, D2)),
        "w_fc2": rnd(ks[10], (D2, N)), "b_fc2": rnd(ks[11], (1, N)),
        "w_fc3": rnd(ks[12], (D2, N)), "b_fc3": rnd(ks[13], (1, N)),
        # D: Linear(D, 2D)
        "w_d": rnd(ks[14], (D, D2)), "b_d": rnd(ks[15], (1, D2)),
        # out_proj: Linear(2D, D), bias initialised to 1.0 (as in the module)
        "w_out": rnd(ks[16], (D2, D)),
        "b_out": jnp.ones((1, D), jnp.float32),
        # TODO(synk): S6.A / dA and RMSNorm exist in __init__ but cannot affect
        # this forward pass (h is zero-initialised, norm is never called).
    }


if __name__ == "__main__":
    # d_model=64 -> 2*d_model=128 keeps all lane slices / the conv roll path
    # tile-aligned even at this toy size.
    batch, seq_len, d_model, state_size = 2, 8, 64, 16

    key = jax.random.PRNGKey(0)
    kx, kp = jax.random.split(key)
    x = jax.random.normal(kx, (batch, seq_len, d_model), jnp.float32)
    params = init_params(kp, seq_len, d_model, state_size)

    out = jax.block_until_ready(mamba_block(x, params))
    ref = mamba_block_reference(x, params)

    assert out.shape == (batch, seq_len, d_model)
    # bf16 matmul operands (f32 accumulation) vs pure-f32 reference -> 2e-2 tol.
    max_err = float(jnp.max(jnp.abs(out - ref)))
    assert jnp.allclose(out, ref, rtol=2e-2, atol=2e-2), (
        f"mismatch vs reference (max abs err {max_err})")

    print("KERNEL_OK")
</pallas_src>

<mosaic_0001>
module attributes {stable_mosaic.version = 11 : i64} {
  func.func @k(%arg0: memref<8x128xf32, #tpu.memory_space<vmem>>, %arg1: memref<8x128xf32, #tpu.memory_space<vmem>>) attributes {dimension_semantics = [], scalar_prefetch = 0 : i64, scratch_operands = 0 : i64, tpu.core_type = #tpu.core_type<tc>} {
    %c0 = arith.constant 0 : index
    %c0_0 = arith.constant 0 : index
    %0 = vector.load %arg0[%c0, %c0_0] : memref<8x128xf32, #tpu.memory_space<vmem>>, vector<8x128xf32>
    %c1_i32 = arith.constant 1 : i32
    %1 = tpu.dynamic_rotate %0 by %c1_i32 dim 1 : vector<8x128xf32>, i32 -> vector<8x128xf32>
    %c0_1 = arith.constant 0 : index
    %c0_2 = arith.constant 0 : index
    %2 = vector.load %arg1[%c0_1, %c0_2] : memref<8x128xf32, #tpu.memory_space<vmem>>, vector<8x128xf32>
    tpu.vector_store %arg1[%c0_1, %c0_2], %1 {strides = array<i32>} : memref<8x128xf32, #tpu.memory_space<vmem>>, vector<8x128xf32>,
    return
  }
}

module attributes {stable_mosaic.version = 11 : i64} {
  func.func @mamba_block_kernel(%arg0: i32, %arg1: memref<1x8x64xf32, #tpu.memory_space<vmem>>, %arg2: memref<64x256xbf16, #tpu.memory_space<vmem>>, %arg3: memref<1x256xf32, #tpu.memory_space<vmem>>, %arg4: memref<24x8xbf16, #tpu.memory_space<vmem>>, %arg5: memref<8x1xf32, #tpu.memory_space<vmem>>, %arg6: memref<128x128xbf16, #tpu.memory_space<vmem>>, %arg7: memref<1x128xf32, #tpu.memory_space<vmem>>, %arg8: memref<128x160xbf16, #tpu.memory_space<vmem>>, %arg9: memref<1x160xf32, #tpu.memory_space<vmem>>, %arg10: memref<128x128xbf16, #tpu.memory_space<vmem>>, %arg11: memref<1x128xf32, #tpu.memory_space<vmem>>, %arg12: memref<1x8x128xf32, #tpu.memory_space<vmem>>) attributes {dimension_semantics = [#tpu.dimension_semantics<parallel>], iteration_bounds = array<i64: 2>, scalar_prefetch = 0 : i64, scratch_operands = 0 : i64, tpu.core_type = #tpu.core_type<tc>, window_params = [{transform_indices = @transform_0, window_bounds = array<i64: 1, 8, 64>}, {pipeline_mode = #tpu.pipeline_mode<synchronous>, transform_indices = @transform_1, window_bounds = array<i64: 64, 256>}, {pipeline_mode = #tpu.pipeline_mode<synchronous>, transform_indices = @transform_2, window_bounds = array<i64: 1, 256>}, {pipeline_mode = #tpu.pipeline_mode<synchronous>, transform_indices = @transform_3, window_bounds = array<i64: 24, 8>}, {pipeline_mode = #tpu.pipeline_mode<synchronous>, transform_indices = @transform_4, window_bounds = array<i64: 8, 1>}, {pipeline_mode = #tpu.pipeline_mode<synchronous>, transform_indices = @transform_5, window_bounds = array<i64: 128, 128>}, {pipeline_mode = #tpu.pipeline_mode<synchronous>, transform_indices = @transform_6, window_bounds = array<i64: 1, 128>}, {pipeline_mode = #tpu.pipeline_mode<synchronous>, transform_indices = @transform_7, window_bounds = array<i64: 128, 160>}, {pipeline_mode = #tpu.pipeline_mode<synchronous>, transform_indices = @transform_8, window_bounds = array<i64: 1, 160>}, {pipeline_mode = #tpu.pipeline_mode<synchronous>, transform_indices = @transform_9, window_bounds = array<i64: 128, 128>}, {pipeline_mode = #tpu.pipeline_mode<synchronous>, transform_indices = @transform_10, window_bounds = array<i64: 1, 128>}, {transform_indices = @transform_11, window_bounds = array<i64: 1, 8, 128>}]} {
    %c0 = arith.constant 0 : index
    %c0_0 = arith.constant 0 : index
    %c0_1 = arith.constant 0 : index
    %0 = vector.load %arg1[%c0, %c0_0, %c0_1] : memref<1x8x64xf32, #tpu.memory_space<vmem>>, vector<1x8x64xf32>
    %1 = vector.shape_cast %0 : vector<1x8x64xf32> to vector<8x64xf32>
    %2 = arith.truncf %1 : vector<8x64xf32> to vector<8x64xbf16>
    %c0_2 = arith.constant 0 : index
    %c0_3 = arith.constant 0 : index
    %3 = vector.load %arg2[%c0_2, %c0_3] : memref<64x256xbf16, #tpu.memory_space<vmem>>, vector<64x256xbf16>
    %cst = arith.constant dense<0.000000e+00> : vector<8x256xf32>
    %4 = tpu.matmul %2, %3, %cst {dimension_numbers = #tpu.dot_dimension_numbers<[1], [0], [0], [1], [0, 0, 1, 1], [], []>} : vector<8x64xbf16>, vector<64x256xbf16>, vector<8x256xf32> -> vector<8x256xf32>
    %c0_4 = arith.constant 0 : index
    %c0_5 = arith.constant 0 : index
    %5 = vector.load %arg3[%c0_4, %c0_5] : memref<1x256xf32, #tpu.memory_space<vmem>>, vector<1x256xf32>
    %6 = vector.broadcast %5 : vector<1x256xf32> to vector<8x256xf32>
    %7 = arith.addf %4, %6 : vector<8x256xf32>
    %8 = vector.extract_strided_slice %7 {offsets = [0, 0], sizes = [8, 128], strides = [1, 1]} : vector<8x256xf32> to vector<8x128xf32>
    %9 = vector.extract_strided_slice %7 {offsets = [0, 128], sizes = [8, 128], strides = [1, 1]} : vector<8x256xf32> to vector<8x128xf32>
    %cst_6 = arith.constant 0.000000e+00 : f32
    %10 = vector.broadcast %cst_6 : f32 to vector<8x128xf32>
    %11 = arith.subf %10, %9 : vector<8x128xf32>
    %12 = math.exp %11 : vector<8x128xf32>
    %cst_7 = arith.constant 1.000000e+00 : f32
    %13 = vector.broadcast %cst_7 : f32 to vector<8x128xf32>
    %14 = arith.addf %13, %12 : vector<8x128xf32>
    %cst_8 = arith.constant 1.000000e+00 : f32
    %15 = vector.broadcast %cst_8 : f32 to vector<8x128xf32>
    %16 = arith.divf %15, %14 : vector<8x128xf32>
    %17 = arith.mulf %9, %16 : vector<8x128xf32>
    %18 = arith.truncf %17 : vector<8x128xf32> to vector<8x128xbf16>
    %19 = vector.shape_cast %8 : vector<8x128xf32> to vector<1x8x128xf32>
    %20 = tpu.transpose %19, [1, 0, 2] : vector<1x8x128xf32> -> vector<8x1x128xf32>
    %21 = vector.shape_cast %20 : vector<8x1x128xf32> to vector<8x128xf32>
    %c0_9 = arith.constant 0 : index
    %c0_10 = arith.constant 0 : index
    %22 = vector.load %arg4[%c0_9, %c0_10] : memref<24x8xbf16, #tpu.memory_space<vmem>>, vector<24x8xbf16>
    %23 = arith.truncf %21 : vector<8x128xf32> to vector<8x128xbf16>
    %cst_11 = arith.constant dense<0.000000e+00> : vector<24x128xf32>
    %24 = tpu.matmul %22, %23, %cst_11 {dimension_numbers = #tpu.dot_dimension_numbers<[1], [0], [0], [1], [0, 0, 1, 1], [], []>} : vector<24x8xbf16>, vector<8x128xbf16>, vector<24x128xf32> -> vector<24x128xf32>
    %25 = vector.extract_strided_slice %24 {offsets = [0, 0], sizes = [8, 128], strides = [1, 1]} : vector<24x128xf32> to vector<8x128xf32>
    %26 = vector.extract_strided_slice %24 {offsets = [8, 0], sizes = [8, 128], strides = [1, 1]} : vector<24x128xf32> to vector<8x128xf32>
    %27 = vector.extract_strided_slice %24 {offsets = [16, 0], sizes = [8, 128], strides = [1, 1]} : vector<24x128xf32> to vector<8x128xf32>
    %cst_12 = arith.constant 0.000000e+00 : f32
    %28 = vector.broadcast %cst_12 : f32 to vector<8x1xf32>
    %29 = vector.extract_strided_slice %25 {offsets = [0, 0], sizes = [8, 127], strides = [1, 1]} : vector<8x128xf32> to vector<8x127xf32>
    %30 = tpu.concatenate %28, %29 in 1 : vector<8x1xf32>, vector<8x127xf32> -> vector<8x128xf32>
    %31 = vector.extract_strided_slice %27 {offsets = [0, 1], sizes = [8, 127], strides = [1, 1]} : vector<8x128xf32> to vector<8x127xf32>
    %32 = tpu.concatenate %31, %28 in 1 : vector<8x127xf32>, vector<8x1xf32> -> vector<8x128xf32>
    %33 = tpu.iota {dimensions = array<i32: 1>} : vector<8x128xi32>
    %c128_i32 = arith.constant 128 : i32
    %c0_i32 = arith.constant 0 : i32
    %34 = arith.cmpi eq, %c128_i32, %c0_i32 : i32
    %c1_i32 = arith.constant 1 : i32
    %35 = arith.select %34, %c1_i32, %c128_i32 : i32
    %36 = vector.broadcast %35 : i32 to vector<8x128xi32>
    %37 = arith.remsi %33, %36 : vector<8x128xi32>
    %c0_i32_13 = arith.constant 0 : i32
    %38 = vector.broadcast %c0_i32_13 : i32 to vector<8x128xi32>
    %39 = arith.cmpi ne, %37, %38 : vector<8x128xi32>
    %c0_i32_14 = arith.constant 0 : i32
    %40 = vector.broadcast %c0_i32_14 : i32 to vector<8x128xi32>
    %41 = arith.cmpi slt, %37, %40 : vector<8x128xi32>
    %c0_i32_15 = arith.constant 0 : i32
    %42 = arith.cmpi slt, %35, %c0_i32_15 : i32
    %43 = vector.broadcast %42 : i1 to vector<8x128xi1>
    %44 = vector.broadcast %43 : vector<8x128xi1> to vector<8x128xi1>
    %45 = arith.xori %41, %44 : vector<8x128xi1>
    %46 = arith.andi %45, %39 : vector<8x128xi1>
    %47 = vector.broadcast %35 : i32 to vector<8x128xi32>
    %48 = arith.addi %37, %47 : vector<8x128xi32>
    %49 = arith.select %46, %48, %37 : vector<8x128xi1>, vector<8x128xi32>
    %c0_i32_16 = arith.constant 0 : i32
    %50 = vector.broadcast %c0_i32_16 : i32 to vector<8x128xi32>
    %51 = arith.cmpi eq, %49, %50 : vector<8x128xi32>
    %cst_17 = arith.constant 0.000000e+00 : f32
    %52 = vector.broadcast %cst_17 : f32 to vector<8x128xf32>
    %53 = arith.select %51, %52, %30 : vector<8x128xi1>, vector<8x128xf32>
    %54 = arith.addf %53, %26 : vector<8x128xf32>
    %c127_i32 = arith.constant 127 : i32
    %55 = vector.broadcast %c127_i32 : i32 to vector<8x128xi32>
    %56 = arith.cmpi eq, %49, %55 : vector<8x128xi32>
    %cst_18 = arith.constant 0.000000e+00 : f32
    %57 = vector.broadcast %cst_18 : f32 to vector<8x128xf32>
    %58 = arith.select %56, %57, %32 : vector<8x128xi1>, vector<8x128xf32>
    %59 = arith.addf %54, %58 : vector<8x128xf32>
    %c0_19 = arith.constant 0 : index
    %c0_20 = arith.constant 0 : index
    %60 = vector.load %arg5[%c0_19, %c0_20] : memref<8x1xf32, #tpu.memory_space<vmem>>, vector<8x1xf32>
    %61 = vector.broadcast %60 : vector<8x1xf32> to vector<8x128xf32>
    %62 = arith.addf %59, %61 : vector<8x128xf32>
    %cst_21 = arith.constant 0.000000e+00 : f32
    %63 = vector.broadcast %cst_21 : f32 to vector<8x128xf32>
    %64 = arith.subf %63, %62 : vector<8x128xf32>
    %65 = math.exp %64 : vector<8x128xf32>
    %cst_22 = arith.constant 1.000000e+00 : f32
    %66 = vector.broadcast %cst_22 : f32 to vector<8x128xf32>
    %67 = arith.addf %66, %65 : vector<8x128xf32>
    %cst_23 = arith.constant 1.000000e+00 : f32
    %68 = vector.broadcast %cst_23 : f32 to vector<8x128xf32>
    %69 = arith.divf %68, %67 : vector<8x128xf32>
    %70 = arith.mulf %62, %69 : vector<8x128xf32>
    %71 = vector.shape_cast %70 : vector<8x128xf32> to vector<8x1x128xf32>
    %72 = tpu.transpose %71, [1, 0, 2] : vector<8x1x128xf32> -> vector<1x8x128xf32>
    %73 = vector.shape_cast %72 : vector<1x8x128xf32> to vector<8x128xf32>
    %74 = arith.truncf %73 : vector<8x128xf32> to vector<8x128xbf16>
    %c0_24 = arith.constant 0 : index
    %c0_25 = arith.constant 0 : index
    %75 = vector.load %arg6[%c0_24, %c0_25] : memref<128x128xbf16, #tpu.memory_space<vmem>>, vector<128x128xbf16>
    %cst_26 = arith.constant dense<0.000000e+00> : vector<8x128xf32>
    %76 = tpu.matmul %74, %75, %cst_26 {dimension_numbers = #tpu.dot_dimension_numbers<[1], [0], [0], [1], [0, 0, 1, 1], [], []>} : vector<8x128xbf16>, vector<128x128xbf16>, vector<8x128xf32> -> vector<8x128xf32>
    %c0_27 = arith.constant 0 : index
    %c0_28 = arith.constant 0 : index
    %77 = vector.load %arg7[%c0_27, %c0_28] : memref<1x128xf32, #tpu.memory_space<vmem>>, vector<1x128xf32>
    %78 = vector.broadcast %77 : vector<1x128xf32> to vector<8x128xf32>
    %79 = arith.addf %76, %78 : vector<8x128xf32>
    %80 = arith.truncf %79 : vector<8x128xf32> to vector<8x128xbf16>
    %c0_29 = arith.constant 0 : index
    %c0_30 = arith.constant 0 : index
    %81 = vector.load %arg8[%c0_29, %c0_30] : memref<128x160xbf16, #tpu.memory_space<vmem>>, vector<128x160xbf16>
    %cst_31 = arith.constant dense<0.000000e+00> : vector<8x160xf32>
    %82 = tpu.matmul %80, %81, %cst_31 {dimension_numbers = #tpu.dot_dimension_numbers<[1], [0], [0], [1], [0, 0, 1, 1], [], []>} : vector<8x128xbf16>, vector<128x160xbf16>, vector<8x160xf32> -> vector<8x160xf32>
    %c0_32 = arith.constant 0 : index
    %c0_33 = arith.constant 0 : index
    %83 = vector.load %arg9[%c0_32, %c0_33] : memref<1x160xf32, #tpu.memory_space<vmem>>, vector<1x160xf32>
    %84 = vector.broadcast %83 : vector<1x160xf32> to vector<8x160xf32>
    %85 = arith.addf %82, %84 : vector<8x160xf32>
    %86 = vector.extract_strided_slice %85 {offsets = [0, 0], sizes = [8, 128], strides = [1, 1]} : vector<8x160xf32> to vector<8x128xf32>
    %cst_34 = arith.constant 0.000000e+00 : f32
    %87 = vector.broadcast %cst_34 : f32 to vector<8x128xf32>
    %88 = arith.maximumf %86, %87 : vector<8x128xf32>
    %89 = math.absf %86 : vector<8x128xf32>
    %cst_35 = arith.constant 0.000000e+00 : f32
    %90 = vector.broadcast %cst_35 : f32 to vector<8x128xf32>
    %91 = arith.subf %90, %89 : vector<8x128xf32>
    %92 = math.exp %91 : vector<8x128xf32>
    %cst_36 = arith.constant 1.000000e+00 : f32
    %93 = vector.broadcast %cst_36 : f32 to vector<8x128xf32>
    %94 = arith.addf %93, %92 : vector<8x128xf32>
    %95 = math.log %94 : vector<8x128xf32>
    %96 = arith.addf %88, %95 : vector<8x128xf32>
    %97 = vector.extract_strided_slice %85 {offsets = [0, 128], sizes = [8, 16], strides = [1, 1]} : vector<8x160xf32> to vector<8x16xf32>
    %98 = vector.extract_strided_slice %85 {offsets = [0, 144], sizes = [8, 16], strides = [1, 1]} : vector<8x160xf32> to vector<8x16xf32>
    %99 = arith.mulf %97, %98 : vector<8x16xf32>
    %cst_37 = arith.constant dense<0.000000e+00> : vector<8xf32>
    %100 = vector.multi_reduction <add>, %99, %cst_37 [1] : vector<8x16xf32> to vector<8xf32>
    %101 = vector.shape_cast %100 : vector<8xf32> to vector<8x1xf32>
    %102 = arith.mulf %79, %96 : vector<8x128xf32>
    %103 = vector.broadcast %101 : vector<8x1xf32> to vector<8x128xf32>
    %104 = arith.mulf %102, %103 : vector<8x128xf32>
    %cst_38 = arith.constant 0.000000e+00 : f32
    %105 = vector.broadcast %cst_38 : f32 to vector<8x128xf32>
    %106 = arith.subf %105, %104 : vector<8x128xf32>
    %107 = math.exp %106 : vector<8x128xf32>
    %cst_39 = arith.constant 1.000000e+00 : f32
    %108 = vector.broadcast %cst_39 : f32 to vector<8x128xf32>
    %109 = arith.addf %108, %107 : vector<8x128xf32>
    %cst_40 = arith.constant 1.000000e+00 : f32
    %110 = vector.broadcast %cst_40 : f32 to vector<8x128xf32>
    %111 = arith.divf %110, %109 : vector<8x128xf32>
    %112 = arith.mulf %104, %111 : vector<8x128xf32>
    %113 = arith.extf %18 : vector<8x128xbf16> to vector<8x128xf32>
    %114 = arith.mulf %112, %113 : vector<8x128xf32>
    %115 = arith.truncf %114 : vector<8x128xf32> to vector<8x128xbf16>
    %c0_41 = arith.constant 0 : index
    %c0_42 = arith.constant 0 : index
    %116 = vector.load %arg10[%c0_41, %c0_42] : memref<128x128xbf16, #tpu.memory_space<vmem>>, vector<128x128xbf16>
    %cst_43 = arith.constant dense<0.000000e+00> : vector<8x128xf32>
    %117 = tpu.matmul %115, %116, %cst_43 {dimension_numbers = #tpu.dot_dimension_numbers<[1], [0], [0], [1], [0, 0, 1, 1], [], []>} : vector<8x128xbf16>, vector<128x128xbf16>, vector<8x128xf32> -> vector<8x128xf32>
    %c0_44 = arith.constant 0 : index
    %c0_45 = arith.constant 0 : index
    %118 = vector.load %arg11[%c0_44, %c0_45] : memref<1x128xf32, #tpu.memory_space<vmem>>, vector<1x128xf32>
    %119 = vector.broadcast %118 : vector<1x128xf32> to vector<8x128xf32>
    %120 = arith.addf %117, %119 : vector<8x128xf32>
    %121 = vector.shape_cast %120 : vector<8x128xf32> to vector<1x8x128xf32>
    %c0_46 = arith.constant 0 : index
    %c0_47 = arith.constant 0 : index
    %c0_48 = arith.constant 0 : index
    %122 = vector.load %arg12[%c0_46, %c0_47, %c0_48] : memref<1x8x128xf32, #tpu.memory_space<vmem>>, vector<1x8x128xf32>
    tpu.vector_store %arg12[%c0_46, %c0_47, %c0_48], %121 {strides = array<i32>} : memref<1x8x128xf32, #tpu.memory_space<vmem>>, vector<1x8x128xf32>,
    return
  }
  func.func @transform_0(%arg0: i32) -> (i32, i32, i32) {
    %c0_i32 = arith.constant 0 : i32
    %c0_i32_0 = arith.constant 0 : i32
    %c0_i32_1 = arith.constant 0 : i32
    return %arg0, %c0_i32, %c0_i32_0 : i32, i32, i32
  }
  func.func @transform_1(%arg0: i32) -> (i32, i32) {
    %c0_i32 = arith.constant 0 : i32
    %c0_i32_0 = arith.constant 0 : i32
    %c0_i32_1 = arith.constant 0 : i32
    return %c0_i32, %c0_i32_0 : i32, i32
  }
  func.func @transform_2(%arg0: i32) -> (i32, i32) {
    %c0_i32 = arith.constant 0 : i32
    %c0_i32_0 = arith.constant 0 : i32
    %c0_i32_1 = arith.constant 0 : i32
    return %c0_i32, %c0_i32_0 : i32, i32
  }
  func.func @transform_3(%arg0: i32) -> (i32, i32) {
    %c0_i32 = arith.constant 0 : i32
    %c0_i32_0 = arith.constant 0 : i32
    %c0_i32_1 = arith.constant 0 : i32
    return %c0_i32, %c0_i32_0 : i32, i32
  }
  func.func @transform_4(%arg0: i32) -> (i32, i32) {
    %c0_i32 = arith.constant 0 : i32
    %c0_i32_0 = arith.constant 0 : i32
    %c0_i32_1 = arith.constant 0 : i32
    return %c0_i32, %c0_i32_0 : i32, i32
  }
  func.func @transform_5(%arg0: i32) -> (i32, i32) {
    %c0_i32 = arith.constant 0 : i32
    %c0_i32_0 = arith.constant 0 : i32
    %c0_i32_1 = arith.constant 0 : i32
    return %c0_i32, %c0_i32_0 : i32, i32
  }
  func.func @transform_6(%arg0: i32) -> (i32, i32) {
    %c0_i32 = arith.constant 0 : i32
    %c0_i32_0 = arith.constant 0 : i32
    %c0_i32_1 = arith.constant 0 : i32
    return %c0_i32, %c0_i32_0 : i32, i32
  }
  func.func @transform_7(%arg0: i32) -> (i32, i32) {
    %c0_i32 = arith.constant 0 : i32
    %c0_i32_0 = arith.constant 0 : i32
    %c0_i32_1 = arith.constant 0 : i32
    return %c0_i32, %c0_i32_0 : i32, i32
  }
  func.func @transform_8(%arg0: i32) -> (i32, i32) {
    %c0_i32 = arith.constant 0 : i32
    %c0_i32_0 = arith.constant 0 : i32
    %c0_i32_1 = arith.constant 0 : i32
    return %c0_i32, %c0_i32_0 : i32, i32
  }
  func.func @transform_9(%arg0: i32) -> (i32, i32) {
    %c0_i32 = arith.constant 0 : i32
    %c0_i32_0 = arith.constant 0 : i32
    %c0_i32_1 = arith.constant 0 : i32
    return %c0_i32, %c0_i32_0 : i32, i32
  }
  func.func @transform_10(%arg0: i32) -> (i32, i32) {
    %c0_i32 = arith.constant 0 : i32
    %c0_i32_0 = arith.constant 0 : i32
    %c0_i32_1 = arith.constant 0 : i32
    return %c0_i32, %c0_i32_0 : i32, i32
  }
  func.func @transform_11(%arg0: i32) -> (i32, i32, i32) {
    %c0_i32 = arith.constant 0 : i32
    %c0_i32_0 = arith.constant 0 : i32
    %c0_i32_1 = arith.constant 0 : i32
    return %arg0, %c0_i32, %c0_i32_0 : i32, i32, i32
  }
}

module attributes {stable_mosaic.version = 11 : i64} {
  func.func @mamba_block_kernel(%arg0: i32, %arg1: memref<1x8x64xf32, #tpu.memory_space<vmem>>, %arg2: memref<64x256xbf16, #tpu.memory_space<vmem>>, %arg3: memref<1x256xf32, #tpu.memory_space<vmem>>, %arg4: memref<24x8xbf16, #tpu.memory_space<vmem>>, %arg5: memref<8x1xf32, #tpu.memory_space<vmem>>, %arg6: memref<128x128xbf16, #tpu.memory_space<vmem>>, %arg7: memref<1x128xf32, #tpu.memory_space<vmem>>, %arg8: memref<128x160xbf16, #tpu.memory_space<vmem>>, %arg9: memref<1x160xf32, #tpu.memory_space<vmem>>, %arg10: memref<128x128xbf16, #tpu.memory_space<vmem>>, %arg11: memref<1x128xf32, #tpu.memory_space<vmem>>, %arg12: memref<1x8x128xf32, #tpu.memory_space<vmem>>) attributes {dimension_semantics = [#tpu.dimension_semantics<parallel>], iteration_bounds = array<i64: 2>, scalar_prefetch = 0 : i64, scratch_operands = 0 : i64, tpu.core_type = #tpu.core_type<tc>, window_params = [{transform_indices = @transform_0, window_bounds = array<i64: 1, 8, 64>}, {pipeline_mode = #tpu.pipeline_mode<synchronous>, transform_indices = @transform_1, window_bounds = array<i64: 64, 256>}, {pipeline_mode = #tpu.pipeline_mode<synchronous>, transform_indices = @transform_2, window_bounds = array<i64: 1, 256>}, {pipeline_mode = #tpu.pipeline_mode<synchronous>, transform_indices = @transform_3, window_bounds = array<i64: 24, 8>}, {pipeline_mode = #tpu.pipeline_mode<synchronous>, transform_indices = @transform_4, window_bounds = array<i64: 8, 1>}, {pipeline_mode = #tpu.pipeline_mode<synchronous>, transform_indices = @transform_5, window_bounds = array<i64: 128, 128>}, {pipeline_mode = #tpu.pipeline_mode<synchronous>, transform_indices = @transform_6, window_bounds = array<i64: 1, 128>}, {pipeline_mode = #tpu.pipeline_mode<synchronous>, transform_indices = @transform_7, window_bounds = array<i64: 128, 160>}, {pipeline_mode = #tpu.pipeline_mode<synchronous>, transform_indices = @transform_8, window_bounds = array<i64: 1, 160>}, {pipeline_mode = #tpu.pipeline_mode<synchronous>, transform_indices = @transform_9, window_bounds = array<i64: 128, 128>}, {pipeline_mode = #tpu.pipeline_mode<synchronous>, transform_indices = @transform_10, window_bounds = array<i64: 1, 128>}, {transform_indices = @transform_11, window_bounds = array<i64: 1, 8, 128>}]} {
    %c0 = arith.constant 0 : index
    %c0_0 = arith.constant 0 : index
    %c0_1 = arith.constant 0 : index
    %0 = vector.load %arg1[%c0, %c0_0, %c0_1] : memref<1x8x64xf32, #tpu.memory_space<vmem>>, vector<1x8x64xf32>
    %1 = vector.shape_cast %0 : vector<1x8x64xf32> to vector<8x64xf32>
    %2 = arith.truncf %1 : vector<8x64xf32> to vector<8x64xbf16>
    %c0_2 = arith.constant 0 : index
    %c0_3 = arith.constant 0 : index
    %3 = vector.load %arg2[%c0_2, %c0_3] : memref<64x256xbf16, #tpu.memory_space<vmem>>, vector<64x256xbf16>
    %cst = arith.constant dense<0.000000e+00> : vector<8x256xf32>
    %4 = tpu.matmul %2, %3, %cst {dimension_numbers = #tpu.dot_dimension_numbers<[1], [0], [0], [1], [0, 0, 1, 1], [], []>} : vector<8x64xbf16>, vector<64x256xbf16>, vector<8x256xf32> -> vector<8x256xf32>
    %c0_4 = arith.constant 0 : index
    %c0_5 = arith.constant 0 : index
    %5 = vector.load %arg3[%c0_4, %c0_5] : memref<1x256xf32, #tpu.memory_space<vmem>>, vector<1x256xf32>
    %6 = vector.broadcast %5 : vector<1x256xf32> to vector<8x256xf32>
    %7 = arith.addf %4, %6 : vector<8x256xf32>
    %8 = vector.extract_strided_slice %7 {offsets = [0, 0], sizes = [8, 128], strides = [1, 1]} : vector<8x256xf32> to vector<8x128xf32>
    %9 = vector.extract_strided_slice %7 {offsets = [0, 128], sizes = [8, 128], strides = [1, 1]} : vector<8x256xf32> to vector<8x128xf32>
    %cst_6 = arith.constant 0.000000e+00 : f32
    %10 = vector.broadcast %cst_6 : f32 to vector<8x128xf32>
    %11 = arith.subf %10, %9 : vector<8x128xf32>
    %12 = math.exp %11 : vector<8x128xf32>
    %cst_7 = arith.constant 1.000000e+00 : f32
    %13 = vector.broadcast %cst_7 : f32 to vector<8x128xf32>
    %14 = arith.addf %13, %12 : vector<8x128xf32>
    %cst_8 = arith.constant 1.000000e+00 : f32
    %15 = vector.broadcast %cst_8 : f32 to vector<8x128xf32>
    %16 = arith.divf %15, %14 : vector<8x128xf32>
    %17 = arith.mulf %9, %16 : vector<8x128xf32>
    %18 = arith.truncf %17 : vector<8x128xf32> to vector<8x128xbf16>
    %19 = vector.shape_cast %8 : vector<8x128xf32> to vector<1x8x128xf32>
    %20 = tpu.transpose %19, [1, 0, 2] : vector<1x8x128xf32> -> vector<8x1x128xf32>
    %21 = vector.shape_cast %20 : vector<8x1x128xf32> to vector<8x128xf32>
    %c0_9 = arith.constant 0 : index
    %c0_10 = arith.constant 0 : index
    %22 = vector.load %arg4[%c0_9, %c0_10] : memref<24x8xbf16, #tpu.memory_space<vmem>>, vector<24x8xbf16>
    %23 = arith.truncf %21 : vector<8x128xf32> to vector<8x128xbf16>
    %cst_11 = arith.constant dense<0.000000e+00> : vector<24x128xf32>
    %24 = tpu.matmul %22, %23, %cst_11 {dimension_numbers = #tpu.dot_dimension_numbers<[1], [0], [0], [1], [0, 0, 1, 1], [], []>} : vector<24x8xbf16>, vector<8x128xbf16>, vector<24x128xf32> -> vector<24x128xf32>
    %25 = vector.extract_strided_slice %24 {offsets = [0, 0], sizes = [8, 128], strides = [1, 1]} : vector<24x128xf32> to vector<8x128xf32>
    %26 = vector.extract_strided_slice %24 {offsets = [8, 0], sizes = [8, 128], strides = [1, 1]} : vector<24x128xf32> to vector<8x128xf32>
    %27 = vector.extract_strided_slice %24 {offsets = [16, 0], sizes = [8, 128], strides = [1, 1]} : vector<24x128xf32> to vector<8x128xf32>
    %cst_12 = arith.constant 0.000000e+00 : f32
    %28 = vector.broadcast %cst_12 : f32 to vector<8x1xf32>
    %29 = vector.extract_strided_slice %25 {offsets = [0, 0], sizes = [8, 127], strides = [1, 1]} : vector<8x128xf32> to vector<8x127xf32>
    %30 = tpu.concatenate %28, %29 in 1 : vector<8x1xf32>, vector<8x127xf32> -> vector<8x128xf32>
    %31 = vector.extract_strided_slice %27 {offsets = [0, 1], sizes = [8, 127], strides = [1, 1]} : vector<8x128xf32> to vector<8x127xf32>
    %32 = tpu.concatenate %31, %28 in 1 : vector<8x127xf32>, vector<8x1xf32> -> vector<8x128xf32>
    %33 = tpu.iota {dimensions = array<i32: 1>} : vector<8x128xi32>
    %c128_i32 = arith.constant 128 : i32
    %c0_i32 = arith.constant 0 : i32
    %34 = arith.cmpi eq, %c128_i32, %c0_i32 : i32
    %c1_i32 = arith.constant 1 : i32
    %35 = arith.select %34, %c1_i32, %c128_i32 : i32
    %36 = vector.broadcast %35 : i32 to vector<8x128xi32>
    %37 = arith.remsi %33, %36 : vector<8x128xi32>
    %c0_i32_13 = arith.constant 0 : i32
    %38 = vector.broadcast %c0_i32_13 : i32 to vector<8x128xi32>
    %39 = arith.cmpi ne, %37, %38 : vector<8x128xi32>
    %c0_i32_14 = arith.constant 0 : i32
    %40 = vector.broadcast %c0_i32_14 : i32 to vector<8x128xi32>
    %41 = arith.cmpi slt, %37, %40 : vector<8x128xi32>
    %c0_i32_15 = arith.constant 0 : i32
    %42 = arith.cmpi slt, %35, %c0_i32_15 : i32
    %43 = vector.broadcast %42 : i1 to vector<8x128xi1>
    %44 = vector.broadcast %43 : vector<8x128xi1> to vector<8x128xi1>
    %45 = arith.xori %41, %44 : vector<8x128xi1>
    %46 = arith.andi %45, %39 : vector<8x128xi1>
    %47 = vector.broadcast %35 : i32 to vector<8x128xi32>
    %48 = arith.addi %37, %47 : vector<8x128xi32>
    %49 = arith.select %46, %48, %37 : vector<8x128xi1>, vector<8x128xi32>
    %c0_i32_16 = arith.constant 0 : i32
    %50 = vector.broadcast %c0_i32_16 : i32 to vector<8x128xi32>
    %51 = arith.cmpi eq, %49, %50 : vector<8x128xi32>
    %cst_17 = arith.constant 0.000000e+00 : f32
    %52 = vector.broadcast %cst_17 : f32 to vector<8x128xf32>
    %53 = arith.select %51, %52, %30 : vector<8x128xi1>, vector<8x128xf32>
    %54 = arith.addf %53, %26 : vector<8x128xf32>
    %c127_i32 = arith.constant 127 : i32
    %55 = vector.broadcast %c127_i32 : i32 to vector<8x128xi32>
    %56 = arith.cmpi eq, %49, %55 : vector<8x128xi32>
    %cst_18 = arith.constant 0.000000e+00 : f32
    %57 = vector.broadcast %cst_18 : f32 to vector<8x128xf32>
    %58 = arith.select %56, %57, %32 : vector<8x128xi1>, vector<8x128xf32>
    %59 = arith.addf %54, %58 : vector<8x128xf32>
    %c0_19 = arith.constant 0 : index
    %c0_20 = arith.constant 0 : index
    %60 = vector.load %arg5[%c0_19, %c0_20] : memref<8x1xf32, #tpu.memory_space<vmem>>, vector<8x1xf32>
    %61 = vector.broadcast %60 : vector<8x1xf32> to vector<8x128xf32>
    %62 = arith.addf %59, %61 : vector<8x128xf32>
    %cst_21 = arith.constant 0.000000e+00 : f32
    %63 = vector.broadcast %cst_21 : f32 to vector<8x128xf32>
    %64 = arith.subf %63, %62 : vector<8x128xf32>
    %65 = math.exp %64 : vector<8x128xf32>
    %cst_22 = arith.constant 1.000000e+00 : f32
    %66 = vector.broadcast %cst_22 : f32 to vector<8x128xf32>
    %67 = arith.addf %66, %65 : vector<8x128xf32>
    %cst_23 = arith.constant 1.000000e+00 : f32
    %68 = vector.broadcast %cst_23 : f32 to vector<8x128xf32>
    %69 = arith.divf %68, %67 : vector<8x128xf32>
    %70 = arith.mulf %62, %69 : vector<8x128xf32>
    %71 = vector.shape_cast %70 : vector<8x128xf32> to vector<8x1x128xf32>
    %72 = tpu.transpose %71, [1, 0, 2] : vector<8x1x128xf32> -> vector<1x8x128xf32>
    %73 = vector.shape_cast %72 : vector<1x8x128xf32> to vector<8x128xf32>
    %74 = arith.truncf %73 : vector<8x128xf32> to vector<8x128xbf16>
    %c0_24 = arith.constant 0 : index
    %c0_25 = arith.constant 0 : index
    %75 = vector.load %arg6[%c0_24, %c0_25] : memref<128x128xbf16, #tpu.memory_space<vmem>>, vector<128x128xbf16>
    %cst_26 = arith.constant dense<0.000000e+00> : vector<8x128xf32>
    %76 = tpu.matmul %74, %75, %cst_26 {dimension_numbers = #tpu.dot_dimension_numbers<[1], [0], [0], [1], [0, 0, 1, 1], [], []>} : vector<8x128xbf16>, vector<128x128xbf16>, vector<8x128xf32> -> vector<8x128xf32>
    %c0_27 = arith.constant 0 : index
    %c0_28 = arith.constant 0 : index
    %77 = vector.load %arg7[%c0_27, %c0_28] : memref<1x128xf32, #tpu.memory_space<vmem>>, vector<1x128xf32>
    %78 = vector.broadcast %77 : vector<1x128xf32> to vector<8x128xf32>
    %79 = arith.addf %76, %78 : vector<8x128xf32>
    %80 = arith.truncf %79 : vector<8x128xf32> to vector<8x128xbf16>
    %c0_29 = arith.constant 0 : index
    %c0_30 = arith.constant 0 : index
    %81 = vector.load %arg8[%c0_29, %c0_30] : memref<128x160xbf16, #tpu.memory_space<vmem>>, vector<128x160xbf16>
    %cst_31 = arith.constant dense<0.000000e+00> : vector<8x160xf32>
    %82 = tpu.matmul %80, %81, %cst_31 {dimension_numbers = #tpu.dot_dimension_numbers<[1], [0], [0], [1], [0, 0, 1, 1], [], []>} : vector<8x128xbf16>, vector<128x160xbf16>, vector<8x160xf32> -> vector<8x160xf32>
    %c0_32 = arith.constant 0 : index
    %c0_33 = arith.constant 0 : index
    %83 = vector.load %arg9[%c0_32, %c0_33] : memref<1x160xf32, #tpu.memory_space<vmem>>, vector<1x160xf32>
    %84 = vector.broadcast %83 : vector<1x160xf32> to vector<8x160xf32>
    %85 = arith.addf %82, %84 : vector<8x160xf32>
    %86 = vector.extract_strided_slice %85 {offsets = [0, 0], sizes = [8, 128], strides = [1, 1]} : vector<8x160xf32> to vector<8x128xf32>
    %cst_34 = arith.constant 0.000000e+00 : f32
    %87 = vector.broadcast %cst_34 : f32 to vector<8x128xf32>
    %88 = arith.maximumf %86, %87 : vector<8x128xf32>
    %89 = math.absf %86 : vector<8x128xf32>
    %cst_35 = arith.constant 0.000000e+00 : f32
    %90 = vector.broadcast %cst_35 : f32 to vector<8x128xf32>
    %91 = arith.subf %90, %89 : vector<8x128xf32>
    %92 = math.exp %91 : vector<8x128xf32>
    %cst_36 = arith.constant 1.000000e+00 : f32
    %93 = vector.broadcast %cst_36 : f32 to vector<8x128xf32>
    %94 = arith.addf %93, %92 : vector<8x128xf32>
    %95 = math.log %94 : vector<8x128xf32>
    %96 = arith.addf %88, %95 : vector<8x128xf32>
    %97 = vector.extract_strided_slice %85 {offsets = [0, 128], sizes = [8, 16], strides = [1, 1]} : vector<8x160xf32> to vector<8x16xf32>
    %98 = vector.extract_strided_slice %85 {offsets = [0, 144], sizes = [8, 16], strides = [1, 1]} : vector<8x160xf32> to vector<8x16xf32>
    %99 = arith.mulf %97, %98 : vector<8x16xf32>
    %cst_37 = arith.constant dense<0.000000e+00> : vector<8xf32>
    %100 = vector.multi_reduction <add>, %99, %cst_37 [1] : vector<8x16xf32> to vector<8xf32>
    %101 = vector.shape_cast %100 : vector<8xf32> to vector<8x1xf32>
    %102 = arith.mulf %79, %96 : vector<8x128xf32>
    %103 = vector.broadcast %101 : vector<8x1xf32> to vector<8x128xf32>
    %104 = arith.mulf %102, %103 : vector<8x128xf32>
    %cst_38 = arith.constant 0.000000e+00 : f32
    %105 = vector.broadcast %cst_38 : f32 to vector<8x128xf32>
    %106 = arith.subf %105, %104 : vector<8x128xf32>
    %107 = math.exp %106 : vector<8x128xf32>
    %cst_39 = arith.constant 1.000000e+00 : f32
    %108 = vector.broadcast %cst_39 : f32 to vector<8x128xf32>
    %109 = arith.addf %108, %107 : vector<8x128xf32>
    %cst_40 = arith.constant 1.000000e+00 : f32
    %110 = vector.broadcast %cst_40 : f32 to vector<8x128xf32>
    %111 = arith.divf %110, %109 : vector<8x128xf32>
    %112 = arith.mulf %104, %111 : vector<8x128xf32>
    %113 = arith.extf %18 : vector<8x128xbf16> to vector<8x128xf32>
    %114 = arith.mulf %112, %113 : vector<8x128xf32>
    %115 = arith.truncf %114 : vector<8x128xf32> to vector<8x128xbf16>
    %c0_41 = arith.constant 0 : index
    %c0_42 = arith.constant 0 : index
    %116 = vector.load %arg10[%c0_41, %c0_42] : memref<128x128xbf16, #tpu.memory_space<vmem>>, vector<128x128xbf16>
    %cst_43 = arith.constant dense<0.000000e+00> : vector<8x128xf32>
    %117 = tpu.matmul %115, %116, %cst_43 {dimension_numbers = #tpu.dot_dimension_numbers<[1], [0], [0], [1], [0, 0, 1, 1], [], []>} : vector<8x128xbf16>, vector<128x128xbf16>, vector<8x128xf32> -> vector<8x128xf32>
    %c0_44 = arith.constant 0 : index
    %c0_45 = arith.constant 0 : index
    %118 = vector.load %arg11[%c0_44, %c0_45] : memref<1x128xf32, #tpu.memory_space<vmem>>, vector<1x128xf32>
    %119 = vector.broadcast %118 : vector<1x128xf32> to vector<8x128xf32>
    %120 = arith.addf %117, %119 : vector<8x128xf32>
    %121 = vector.shape_cast %120 : vector<8x128xf32> to vector<1x8x128xf32>
    %c0_46 = arith.constant 0 : index
    %c0_47 = arith.constant 0 : index
    %c0_48 = arith.constant 0 : index
    %122 = vector.load %arg12[%c0_46, %c0_47, %c0_48] : memref<1x8x128xf32, #tpu.memory_space<vmem>>, vector<1x8x128xf32>
    tpu.vector_store %arg12[%c0_46, %c0_47, %c0_48], %121 {strides = array<i32>} : memref<1x8x128xf32, #tpu.memory_space<vmem>>, vector<1x8x128xf32>,
    return
  }
  func.func @transform_0(%arg0: i32) -> (i32, i32, i32) {
    %c0_i32 = arith.constant 0 : i32
    %c0_i32_0 = arith.constant 0 : i32
    %c0_i32_1 = arith.constant 0 : i32
    return %arg0, %c0_i32, %c0_i32_0 : i32, i32, i32
  }
  func.func @transform_1(%arg0: i32) -> (i32, i32) {
    %c0_i32 = arith.constant 0 : i32
    %c0_i32_0 = arith.constant 0 : i32
    %c0_i32_1 = arith.constant 0 : i32
    return %c0_i32, %c0_i32_0 : i32, i32
  }
  func.func @transform_2(%arg0: i32) -> (i32, i32) {
    %c0_i32 = arith.constant 0 : i32
    %c0_i32_0 = arith.constant 0 : i32
    %c0_i32_1 = arith.constant 0 : i32
    return %c0_i32, %c0_i32_0 : i32, i32
  }
  func.func @transform_3(%arg0: i32) -> (i32, i32) {
    %c0_i32 = arith.constant 0 : i32
    %c0_i32_0 = arith.constant 0 : i32
    %c0_i32_1 = arith.constant 0 : i32
    return %c0_i32, %c0_i32_0 : i32, i32
  }
  func.func @transform_4(%arg0: i32) -> (i32, i32) {
    %c0_i32 = arith.constant 0 : i32
    %c0_i32_0 = arith.constant 0 : i32
    %c0_i32_1 = arith.constant 0 : i32
    return %c0_i32, %c0_i32_0 : i32, i32
  }
  func.func @transform_5(%arg0: i32) -> (i32, i32) {
    %c0_i32 = arith.constant 0 : i32
    %c0_i32_0 = arith.constant 0 : i32
    %c0_i32_1 = arith.constant 0 : i32
    return %c0_i32, %c0_i32_0 : i32, i32
  }
  func.func @transform_6(%arg0: i32) -> (i32, i32) {
    %c0_i32 = arith.constant 0 : i32
    %c0_i32_0 = arith.constant 0 : i32
    %c0_i32_1 = arith.constant 0 : i32
    return %c0_i32, %c0_i32_0 : i32, i32
  }
  func.func @transform_7(%arg0: i32) -> (i32, i32) {
    %c0_i32 = arith.constant 0 : i32
    %c0_i32_0 = arith.constant 0 : i32
    %c0_i32_1 = arith.constant 0 : i32
    return %c0_i32, %c0_i32_0 : i32, i32
  }
  func.func @transform_8(%arg0: i32) -> (i32, i32) {
    %c0_i32 = arith.constant 0 : i32
    %c0_i32_0 = arith.constant 0 : i32
    %c0_i32_1 = arith.constant 0 : i32
    return %c0_i32, %c0_i32_0 : i32, i32
  }
  func.func @transform_9(%arg0: i32) -> (i32, i32) {
    %c0_i32 = arith.constant 0 : i32
    %c0_i32_0 = arith.constant 0 : i32
    %c0_i32_1 = arith.constant 0 : i32
    return %c0_i32, %c0_i32_0 : i32, i32
  }
  func.func @transform_10(%arg0: i32) -> (i32, i32) {
    %c0_i32 = arith.constant 0 : i32
    %c0_i32_0 = arith.constant 0 : i32
    %c0_i32_1 = arith.constant 0 : i32
    return %c0_i32, %c0_i32_0 : i32, i32
  }
  func.func @transform_11(%arg0: i32) -> (i32, i32, i32) {
    %c0_i32 = arith.constant 0 : i32
    %c0_i32_0 = arith.constant 0 : i32
    %c0_i32_1 = arith.constant 0 : i32
    return %arg0, %c0_i32, %c0_i32_0 : i32, i32, i32
  }
}

</mosaic_0001>

<llo_original>
// kernel: tpu_custom_call.1
$region0: #{tpu_custom_call.1}
  #allocation0 [shape = 'u32[]', space=smem, size = 0x4, offset = 0x4, fixed_abs, tag = 'smem constant byte address 0x4 - core index']
  #allocation1 [shape = 'u32[144,128]{1,0:T(1,128)}', space=vmem, size = 0x12000, scoped, tag = 'internal scratch']
  %s0 = inlined_call_operand.hbm [shape: f32[8,128], index: 0, kind: input, shape index: {}]
  %s1 = inlined_call_operand.hbm [shape: f32[8,128], index: 1, kind: output, shape index: {}]
  %s2 = sld [smem:[#allocation0]]
  $region18: #{tpu_custom_call.1} parent=0
    _
  %s4 = ssub.s32 1, %s2
  %s5 = scalar_select 0, %s4, %s2
  $region1: #{tpu_custom_call.1} parent=0
    #allocation2 [shape = 'u8[4096]{0}', space=vmem, size = 0x1000, scoped, tag = 'input window, operand 0, single buffered']
    #allocation3 [shape = 's32[1]{0}', space=sflag, size = 0x4, scoped, tag = 'scoped memory for tpu_custom_call.1']
    #allocation4 [shape = 's32[1]{0}', space=sflag, size = 0x4, scoped, tag = 'scoped memory for tpu_custom_call.1']
    #allocation5 [shape = 'u8[4096]{0}', space=vmem, size = 0x1000, scoped, tag = 'output window, operand 0, single buffered']
    %6 = vsyncpa [#allocation3], 0
    %7 = vsyncpa [#allocation4], 0
    // Predicated region
    $region2: #{tpu_custom_call.1} parent=1 // pred_check
      _
    $region3: #{tpu_custom_call.1} parent=1 // pred_check_branch
      %9 = sbr.rel (0) target = $region5
    $region4: #{tpu_custom_call.1} parent=1 // pred_region
      %s11 = ssub.s32 128, 128
      %12 = vsyncadd [#allocation3], %s11
      %s14 = sshll.u32 [#allocation2], 4
      %s15 = int_to_ptr.vmem [resolvable:$true] %s14
      %17 = dma.hbm_to_vmem [thread:$0]  %s0, 128, %s15, [#allocation3]
    $region5: #{tpu_custom_call.1} parent=1 // pred_fallthru
      _
    // Predicated region
    $region6: #{tpu_custom_call.1} parent=1 // pred_check
      _
    $region7: #{tpu_custom_call.1} parent=1 // pred_check_branch
      %19 = sbr.rel (0) target = $region9
    $region8: #{tpu_custom_call.1} parent=1 // pred_region
      %20 = dma.done [#allocation3], 128
    $region9: #{tpu_custom_call.1} parent=1 // pred_fallthru
      _
    %v21 = vld [vmem:[#allocation2] sm:$0xff]
    %22 = vrot.lane.b32.xlu0 %v21, 1
    %v23 = vpop.permute.xlu0 %22
    %24 = vst [vmem:[#allocation5] sm:$0xff] %v23
    // Predicated region
    $region10: #{tpu_custom_call.1} parent=1 // pred_check
      _
    $region11: #{tpu_custom_call.1} parent=1 // pred_check_branch
      %26 = sbr.rel (0) target = $region13
    $region12: #{tpu_custom_call.1} parent=1 // pred_region
      %s28 = ssub.s32 128, 128
      %29 = vsyncadd [#allocation4], %s28
      %s31 = sshll.u32 [#allocation5], 4
      %s32 = int_to_ptr.vmem [resolvable:$true] %s31
      %34 = dma.vmem_to_hbm [thread:$0]  %s32, 128, %s1, [#allocation4]
    $region13: #{tpu_custom_call.1} parent=1 // pred_fallthru
      _
    // Predicated region
    $region14: #{tpu_custom_call.1} parent=1 // pred_check
      _
    $region15: #{tpu_custom_call.1} parent=1 // pred_check_branch
      %36 = sbr.rel (0) target = $region17
    $region16: #{tpu_custom_call.1} parent=1 // pred_region
      %37 = dma.done [#allocation4], 128
    $region17: #{tpu_custom_call.1} parent=1 // pred_fallthru
      _
    %38 = vsyncpa [#allocation3], 1
    %39 = vsyncpa [#allocation4], 1

// kernel: tpu_custom_call.1
$region0: #{tpu_custom_call.1}
  #allocation0 [shape = 'u32[]', space=smem, size = 0x4, offset = 0x4, fixed_abs, tag = 'smem constant byte address 0x4 - core index']
  #allocation1 [shape = 'u32[144,128]{1,0:T(1,128)}', space=vmem, size = 0x12000, scoped, tag = 'internal scratch']
  %s0 = inlined_call_operand.vmem [shape: f32[2,8,64], index: 0, kind: input, shape index: {}]
  %s1 = inlined_call_operand.vmem [shape: bf16[64,256], index: 1, kind: input, shape index: {}]
  %s2 = inlined_call_operand.vmem [shape: f32[1,256], index: 2, kind: input, shape index: {}]
  %s3 = inlined_call_operand.vmem [shape: bf16[24,8], index: 3, kind: input, shape index: {}]
  %s4 = inlined_call_operand.vmem [shape: f32[8,1], index: 4, kind: input, shape index: {}]
  %s5 = inlined_call_operand.vmem [shape: bf16[128,128], index: 5, kind: input, shape index: {}]
  %s6 = inlined_call_operand.vmem [shape: f32[1,128], index: 6, kind: input, shape index: {}]
  %s7 = inlined_call_operand.vmem [shape: bf16[128,160], index: 7, kind: input, shape index: {}]
  %s8 = inlined_call_operand.vmem [shape: f32[1,160], index: 8, kind: input, shape index: {}]
  %s9 = inlined_call_operand.vmem [shape: bf16[128,128], index: 9, kind: input, shape index: {}]
  %s10 = inlined_call_operand.vmem [shape: f32[1,128], index: 10, kind: input, shape index: {}]
  %s11 = inlined_call_operand.hbm [shape: f32[2,8,128], index: 11, kind: output, shape index: {}]
  %s12 = sld [smem:[#allocation0]]
  $region77: #{tpu_custom_call.1} parent=0
    _
  %s14 = ssub.s32 1, %s12
  %s15 = scalar_select 0, %s14, %s12
  $region1: #{tpu_custom_call.1} parent=0
    #allocation2 [shape = 'u8[8192]{0}', space=vmem, size = 0x2000, scoped, tag = 'output window, operand 0']
    #allocation3 [shape = 's32[2]{0}', space=sflag, size = 0x8, scoped, tag = 'scoped memory for tpu_custom_call.1']
    %16 = vsyncpa [#allocation3], 0
    %s17 = scalar_lea.sflag [#allocation3], 1
    %18 = vsyncpa %s17, 0
    loop: start=0, step=1, limit=4
    $region2: #{tpu_custom_call.1} parent=1 // loop_pre_header
      _
    $region3: #{tpu_custom_call.1} parent=1 // loop_header
      %s20 = sphi 0, %s24
      %p21 = scmp.ge.s32.totalorder %s20, 4
      %s30 = sphi 0, %s32
      %s33 = sphi 0, %s30
      %s34 = sphi 0, %s33
      %s50 = sphi 0, %s34
      %s54 = sphi 0, %s54
      %s56 = sphi 0, %s54
      %s57 = sphi 0, %s56
      %s71 = sphi 0, %s57
      %s75 = sphi 0, %s75
      %s77 = sphi 0, %s75
      %s78 = sphi 0, %s77
      %s92 = sphi 0, %s78
      %s96 = sphi 0, %s96
      %s98 = sphi 0, %s96
      %s99 = sphi 0, %s98
      %s113 = sphi 0, %s99
      %s117 = sphi 0, %s117
      %s119 = sphi 0, %s117
      %s120 = sphi 0, %s119
      %s134 = sphi 0, %s120
      %s138 = sphi 0, %s138
      %s140 = sphi 0, %s138
      %s141 = sphi 0, %s140
      %s155 = sphi 0, %s141
      %s159 = sphi 0, %s159
      %s161 = sphi 0, %s159
      %s162 = sphi 0, %s161
      %s176 = sphi 0, %s162
      %s180 = sphi 0, %s180
      %s182 = sphi 0, %s180
      %s183 = sphi 0, %s182
      %s197 = sphi 0, %s183
      %s201 = sphi 0, %s201
      %s203 = sphi 0, %s201
      %s204 = sphi 0, %s203
      %s218 = sphi 0, %s204
      %s222 = sphi 0, %s222
      %s224 = sphi 0, %s222
      %s225 = sphi 0, %s224
      %s239 = sphi 0, %s225
      %s243 = sphi 0, %s243
      %s245 = sphi 0, %s243
      %s246 = sphi 0, %s245
      %s260 = sphi 0, %s246
      %s266 = sphi 0, %s268
      %s269 = sphi 0, %s266
      %s270 = sphi 0, %s269
      %s286 = sphi 0, %s270
    $region4: #{tpu_custom_call.1} parent=1 // loop_header_branch
      %23 = sbr.rel (%p21) target = $region8
    $region5: #{tpu_custom_call.1} parent=1 // loop_body
      %s25 = ssub.s32 %s20, 1
      %s26 = ssub.s32 %s20, 2
      %s27 = sadd.s32 %s20, 1
      %s28 = ssub.s32 %s20, %s27
      %p29 = scmp.eq.s32.totalorder %s28, 0
      %s31 = sadd.s32 %s30, 1
      %s32 = scalar_select %p29, %s30, %s31
      %p35 = pneg %p29
      %p36 = scmp.eq.s32.totalorder %s20, 1
      %p37 = por %p35, %p36
      %p38 = scmp.ne.s32.totalorder %s30, %s33
      %p39 = scmp.eq.s32.totalorder %s20, 0
      %p40 = por %p38, %p39
      %p41 = scmp.ne.s32.totalorder %s30, %s33
      %p42 = scmp.eq.s32.totalorder %s25, 1
      %p43 = por %p41, %p42
      %p44 = scmp.ne.s32.totalorder %s33, %s34
      %p45 = scmp.eq.s32.totalorder %s25, 0
      %p46 = por %p44, %p45
      %p47 = scmp.ne.s32.totalorder %s33, %s34
      %p48 = scmp.eq.s32.totalorder %s26, 1
      %p49 = por %p47, %p48
      %p51 = scmp.ne.s32.totalorder %s34, %s50
      %p52 = scmp.eq.s32.totalorder %s26, 0
      %p53 = por %p51, %p52
      %s55 = sadd.s32 %s54, 1
      %p58 = scmp.eq.s32.totalorder %s20, 1
      %p59 = scmp.ne.s32.totalorder %s54, %s56
      %p60 = scmp.eq.s32.totalorder %s20, 0
      %p61 = por %p59, %p60
      %p62 = scmp.ne.s32.totalorder %s54, %s56
      %p63 = scmp.eq.s32.totalorder %s25, 1
      %p64 = por %p62, %p63
      %p65 = scmp.ne.s32.totalorder %s56, %s57
      %p66 = scmp.eq.s32.totalorder %s25, 0
      %p67 = por %p65, %p66
      %p68 = scmp.ne.s32.totalorder %s56, %s57
      %p69 = scmp.eq.s32.totalorder %s26, 1
      %p70 = por %p68, %p69
      %p72 = scmp.ne.s32.totalorder %s57, %s71
      %p73 = scmp.eq.s32.totalorder %s26, 0
      %p74 = por %p72, %p73
      %s76 = sadd.s32 %s75, 1
      %p79 = scmp.eq.s32.totalorder %s20, 1
      %p80 = scmp.ne.s32.totalorder %s75, %s77
      %p81 = scmp.eq.s32.totalorder %s20, 0
      %p82 = por %p80, %p81
      %p83 = scmp.ne.s32.totalorder %s75, %s77
      %p84 = scmp.eq.s32.totalorder %s25, 1
      %p85 = por %p83, %p84
      %p86 = scmp.ne.s32.totalorder %s77, %s78
      %p87 = scmp.eq.s32.totalorder %s25, 0
      %p88 = por %p86, %p87
      %p89 = scmp.ne.s32.totalorder %s77, %s78
      %p90 = scmp.eq.s32.totalorder %s26, 1
      %p91 = por %p89, %p90
      %p93 = scmp.ne.s32.totalorder %s78, %s92
      %p94 = scmp.eq.s32.totalorder %s26, 0
      %p95 = por %p93, %p94
      %s97 = sadd.s32 %s96, 1
      %p100 = scmp.eq.s32.totalorder %s20, 1
      %p101 = scmp.ne.s32.totalorder %s96, %s98
      %p102 = scmp.eq.s32.totalorder %s20, 0
      %p103 = por %p101, %p102
      %p104 = scmp.ne.s32.totalorder %s96, %s98
      %p105 = scmp.eq.s32.totalorder %s25, 1
      %p106 = por %p104, %p105
      %p107 = scmp.ne.s32.totalorder %s98, %s99
      %p108 = scmp.eq.s32.totalorder %s25, 0
      %p109 = por %p107, %p108
      %p110 = scmp.ne.s32.totalorder %s98, %s99
      %p111 = scmp.eq.s32.totalorder %s26, 1
      %p112 = por %p110, %p111
      %p114 = scmp.ne.s32.totalorder %s99, %s113
      %p115 = scmp.eq.s32.totalorder %s26, 0
      %p116 = por %p114, %p115
      %s118 = sadd.s32 %s117, 1
      %p121 = scmp.eq.s32.totalorder %s20, 1
      %p122 = scmp.ne.s32.totalorder %s117, %s119
      %p123 = scmp.eq.s32.totalorder %s20, 0
      %p124 = por %p122, %p123
      %p125 = scmp.ne.s32.totalorder %s117, %s119
      %p126 = scmp.eq.s32.totalorder %s25, 1
      %p127 = por %p125, %p126
      %p128 = scmp.ne.s32.totalorder %s119, %s120
      %p129 = scmp.eq.s32.totalorder %s25, 0
      %p130 = por %p128, %p129
      %p131 = scmp.ne.s32.totalorder %s119, %s120
      %p132 = scmp.eq.s32.totalorder %s26, 1
      %p133 = por %p131, %p132
      %p135 = scmp.ne.s32.totalorder %s120, %s134
      %p136 = scmp.eq.s32.totalorder %s26, 0
      %p137 = por %p135, %p136
      %s139 = sadd.s32 %s138, 1
      %p142 = scmp.eq.s32.totalorder %s20, 1
      %p143 = scmp.ne.s32.totalorder %s138, %s140
      %p144 = scmp.eq.s32.totalorder %s20, 0
      %p145 = por %p143, %p144
      %p146 = scmp.ne.s32.totalorder %s138, %s140
      %p147 = scmp.eq.s32.totalorder %s25, 1
      %p148 = por %p146, %p147
      %p149 = scmp.ne.s32.totalorder %s140, %s141
      %p150 = scmp.eq.s32.totalorder %s25, 0
      %p151 = por %p149, %p150
      %p152 = scmp.ne.s32.totalorder %s140, %s141
      %p153 = scmp.eq.s32.totalorder %s26, 1
      %p154 = por %p152, %p153
      %p156 = scmp.ne.s32.totalorder %s141, %s155
      %p157 = scmp.eq.s32.totalorder %s26, 0
      %p158 = por %p156, %p157
      %s160 = sadd.s32 %s159, 1
      %p163 = scmp.eq.s32.totalorder %s20, 1
      %p164 = scmp.ne.s32.totalorder %s159, %s161
      %p165 = scmp.eq.s32.totalorder %s20, 0
      %p166 = por %p164, %p165
      %p167 = scmp.ne.s32.totalorder %s159, %s161
      %p168 = scmp.eq.s32.totalorder %s25, 1
      %p169 = por %p167, %p168
      %p170 = scmp.ne.s32.totalorder %s161, %s162
      %p171 = scmp.eq.s32.totalorder %s25, 0
      %p172 = por %p170, %p171
      %p173 = scmp.ne.s32.totalorder %s161, %s162
      %p174 = scmp.eq.s32.totalorder %s26, 1
      %p175 = por %p173, %p174
      %p177 = scmp.ne.s32.totalorder %s162, %s176
      %p178 = scmp.eq.s32.totalorder %s26, 0
      %p179 = por %p177, %p178
      %s181 = sadd.s32 %s180, 1
      %p184 = scmp.eq.s32.totalorder %s20, 1
      %p185 = scmp.ne.s32.totalorder %s180, %s182
      %p186 = scmp.eq.s32.totalorder %s20, 0
      %p187 = por %p185, %p186
      %p188 = scmp.ne.s32.totalorder %s180, %s182
      %p189 = scmp.eq.s32.totalorder %s25, 1
      %p190 = por %p188, %p189
      %p191 = scmp.ne.s32.totalorder %s182, %s183
      %p192 = scmp.eq.s32.totalorder %s25, 0
      %p193 = por %p191, %p192
      %p194 = scmp.ne.s32.totalorder %s182, %s183
      %p195 = scmp.eq.s32.totalorder %s26, 1
      %p196 = por %p194, %p195
      %p198 = scmp.ne.s32.totalorder %s183, %s197
      %p199 = scmp.eq.s32.totalorder %s26, 0
      %p200 = por %p198, %p199
      %s202 = sadd.s32 %s201, 1
      %p205 = scmp.eq.s32.totalorder %s20, 1
      %p206 = scmp.ne.s32.totalorder %s201, %s203
      %p207 = scmp.eq.s32.totalorder %s20, 0
      %p208 = por %p206, %p207
      %p209 = scmp.ne.s32.totalorder %s201, %s203
      %p210 = scmp.eq.s32.totalorder %s25, 1
      %p211 = por %p209, %p210
      %p212 = scmp.ne.s32.totalorder %s203, %s204
      %p213 = scmp.eq.s32.totalorder %s25, 0
      %p214 = por %p212, %p213
      %p215 = scmp.ne.s32.totalorder %s203, %s204
      %p216 = scmp.eq.s32.totalorder %s26, 1
      %p217 = por %p215, %p216
      %p219 = scmp.ne.s32.totalorder %s204, %s218
      %p220 = scmp.eq.s32.totalorder %s26, 0
      %p221 = por %p219, %p220
      %s223 = sadd.s32 %s222, 1
      %p226 = scmp.eq.s32.totalorder %s20, 1
      %p227 = scmp.ne.s32.totalorder %s222, %s224
      %p228 = scmp.eq.s32.totalorder %s20, 0
      %p229 = por %p227, %p228
      %p230 = scmp.ne.s32.totalorder %s222, %s224
      %p231 = scmp.eq.s32.totalorder %s25, 1
      %p232 = por %p230, %p231
      %p233 = scmp.ne.s32.totalorder %s224, %s225
      %p234 = scmp.eq.s32.totalorder %s25, 0
      %p235 = por %p233, %p234
      %p236 = scmp.ne.s32.totalorder %s224, %s225
      %p237 = scmp.eq.s32.totalorder %s26, 1
      %p238 = por %p236, %p237
      %p240 = scmp.ne.s32.totalorder %s225, %s239
      %p241 = scmp.eq.s32.totalorder %s26, 0
      %p242 = por %p240, %p241
      %s244 = sadd.s32 %s243, 1
      %p247 = scmp.eq.s32.totalorder %s20, 1
      %p248 = scmp.ne.s32.totalorder %s243, %s245
      %p249 = scmp.eq.s32.totalorder %s20, 0
      %p250 = por %p248, %p249
      %p251 = scmp.ne.s32.totalorder %s243, %s245
      %p252 = scmp.eq.s32.totalorder %s25, 1
      %p253 = por %p251, %p252
      %p254 = scmp.ne.s32.totalorder %s245, %s246
      %p255 = scmp.eq.s32.totalorder %s25, 0
      %p256 = por %p254, %p255
      %p257 = scmp.ne.s32.totalorder %s245, %s246
      %p258 = scmp.eq.s32.totalorder %s26, 1
      %p259 = por %p257, %p258
      %p261 = scmp.ne.s32.totalorder %s246, %s260
      %p262 = scmp.eq.s32.totalorder %s26, 0
      %p263 = por %p261, %p262
      %s264 = ssub.s32 %s20, %s27
      %p265 = scmp.eq.s32.totalorder %s264, 0
      %s267 = sadd.s32 %s266, 1
      %s268 = scalar_select %p265, %s266, %s267
      %p271 = pneg %p265
      %p272 = scmp.eq.s32.totalorder %s20, 1
      %p273 = por %p271, %p272
      %p274 = scmp.ne.s32.totalorder %s266, %s269
      %p275 = scmp.eq.s32.totalorder %s20, 0
      %p276 = por %p274, %p275
      %p277 = scmp.ne.s32.totalorder %s266, %s269
      %p278 = scmp.eq.s32.totalorder %s25, 1
      %p279 = por %p277, %p278
      %p280 = scmp.ne.s32.totalorder %s269, %s270
      %p281 = scmp.eq.s32.totalorder %s25, 0
      %p282 = por %p280, %p281
      %p283 = scmp.ne.s32.totalorder %s269, %s270
      %p284 = scmp.eq.s32.totalorder %s26, 1
      %p285 = por %p283, %p284
      %p287 = scmp.ne.s32.totalorder %s270, %s286
      %p288 = scmp.eq.s32.totalorder %s26, 0
      %p289 = por %p287, %p288
      %p290 = scmp.le.s32.totalorder 1, %s20
      %p291 = scmp.lt.s32.totalorder %s20, 3
      %p292 = pnand %p290, %p291
      %p293 = pneg %p292
      // Predicated region
      $region9: #{tpu_custom_call.1} parent=5 // pred_check
        _
      $region10: #{tpu_custom_call.1} parent=5 // pred_check_branch
        %295 = sbr.rel (%p292) target = $region12
      $region11: #{tpu_custom_call.1} parent=5 // pred_region
        %s296 = ssub.s32 %s20, 1
        // Predicated region
        $region13: #{tpu_custom_call.1} parent=11 // pred_check
          %p297 = pneg %p67
        $region14: #{tpu_custom_call.1} parent=11 // pred_check_branch
          %299 = sbr.rel (%p297) target = $region16
        $region15: #{tpu_custom_call.1} parent=11 // pred_region
          _
        $region16: #{tpu_custom_call.1} parent=11 // pred_fallthru
          _
        // Predicated region
        $region17: #{tpu_custom_call.1} parent=11 // pred_check
          %p300 = pneg %p88
        $region18: #{tpu_custom_call.1} parent=11 // pred_check_branch
          %302 = sbr.rel (%p300) target = $region20
        $region19: #{tpu_custom_call.1} parent=11 // pred_region
          _
        $region20: #{tpu_custom_call.1} parent=11 // pred_fallthru
          _
        // Predicated region
        $region21: #{tpu_custom_call.1} parent=11 // pred_check
          %p303 = pneg %p109
        $region22: #{tpu_custom_call.1} parent=11 // pred_check_branch
          %305 = sbr.rel (%p303) target = $region24
        $region23: #{tpu_custom_call.1} parent=11 // pred_region
          _
        $region24: #{tpu_custom_call.1} parent=11 // pred_fallthru
          _
        // Predicated region
        $region25: #{tpu_custom_call.1} parent=11 // pred_check
          %p306 = pneg %p130
        $region26: #{tpu_custom_call.1} parent=11 // pred_check_branch
          %308 = sbr.rel (%p306) target = $region28
        $region27: #{tpu_custom_call.1} parent=11 // pred_region
          _
        $region28: #{tpu_custom_call.1} parent=11 // pred_fallthru
          _
        // Predicated region
        $region29: #{tpu_custom_call.1} parent=11 // pred_check
          %p309 = pneg %p151
        $region30: #{tpu_custom_call.1} parent=11 // pred_check_branch
          %311 = sbr.rel (%p309) target = $region32
        $region31: #{tpu_custom_call.1} parent=11 // pred_region
          _
        $region32: #{tpu_custom_call.1} parent=11 // pred_fallthru
          _
        // Predicated region
        $region33: #{tpu_custom_call.1} parent=11 // pred_check
          %p312 = pneg %p172
        $region34: #{tpu_custom_call.1} parent=11 // pred_check_branch
          %314 = sbr.rel (%p312) target = $region36
        $region35: #{tpu_custom_call.1} parent=11 // pred_region
          _
        $region36: #{tpu_custom_call.1} parent=11 // pred_fallthru
          _
        // Predicated region
        $region37: #{tpu_custom_call.1} parent=11 // pred_check
          %p315 = pneg %p193
        $region38: #{tpu_custom_call.1} parent=11 // pred_check_branch
          %317 = sbr.rel (%p315) target = $region40
        $region39: #{tpu_custom_call.1} parent=11 // pred_region
          _
        $region40: #{tpu_custom_call.1} parent=11 // pred_fallthru
          _
        // Predicated region
        $region41: #{tpu_custom_call.1} parent=11 // pred_check
          %p318 = pneg %p214
        $region42: #{tpu_custom_call.1} parent=11 // pred_check_branch
          %320 = sbr.rel (%p318) target = $region44
        $region43: #{tpu_custom_call.1} parent=11 // pred_region
          _
        $region44: #{tpu_custom_call.1} parent=11 // pred_fallthru
          _
        // Predicated region
        $region45: #{tpu_custom_call.1} parent=11 // pred_check
          %p321 = pneg %p235
        $region46: #{tpu_custom_call.1} parent=11 // pred_check_branch
          %323 = sbr.rel (%p321) target = $region48
        $region47: #{tpu_custom_call.1} parent=11 // pred_region
          _
        $region48: #{tpu_custom_call.1} parent=11 // pred_fallthru
          _
        // Predicated region
        $region49: #{tpu_custom_call.1} parent=11 // pred_check
          %p324 = pneg %p256
        $region50: #{tpu_custom_call.1} parent=11 // pred_check_branch
          %326 = sbr.rel (%p324) target = $region52
        $region51: #{tpu_custom_call.1} parent=11 // pred_region
          _
        $region52: #{tpu_custom_call.1} parent=11 // pred_fallthru
          _
      $region12: #{tpu_custom_call.1} parent=5 // pred_fallthru
        _
      %p327 = scmp.lt.s32.totalorder %s20, 2
      // Predicated region
      $region53: #{tpu_custom_call.1} parent=5 // pred_check
        %p328 = pneg %p327
      $region54: #{tpu_custom_call.1} parent=5 // pred_check_branch
        %330 = sbr.rel (%p328) target = $region56
      $region55: #{tpu_custom_call.1} parent=5 // pred_region
        // Predicated region
        $region57: #{tpu_custom_call.1} parent=55 // pred_check
          %p331 = pneg %p40
        $region58: #{tpu_custom_call.1} parent=55 // pred_check_branch
          %333 = sbr.rel (%p331) target = $region60
        $region59: #{tpu_custom_call.1} parent=55 // pred_region
          %p334 = scmp.lt.s32.totalorder %s20, 1
          %s335 = scalar_select %p334, %s20, 1
          %s336 = smul.addr %s335, 8
          %s337 = scalar_lea.vmem %s0, %s336
        $region60: #{tpu_custom_call.1} parent=55 // pred_fallthru
          _
      $region56: #{tpu_custom_call.1} parent=5 // pred_fallthru
        _
      %p338 = scmp.le.s32.totalorder 1, %s20
      %p339 = scmp.lt.s32.totalorder %s20, 3
      %p340 = pnand %p338, %p339
      %p341 = pneg %p340
      // Predicated region
      $region61: #{tpu_custom_call.1} parent=5 // pred_check
        _
      $region62: #{tpu_custom_call.1} parent=5 // pred_check_branch
        %343 = sbr.rel (%p340) target = $region64
      $region63: #{tpu_custom_call.1} parent=5 // pred_region
        %s344 = ssub.s32 %s20, 1
        %p345 = scmp.lt.s32.totalorder %s25, 1
        %s346 = scalar_select %p345, %s25, 1
        %s347 = smul.addr %s346, 8
        %s348 = scalar_lea.vmem %s0, %s347
        %p349 = pneg %p46
        %p350 = pneg %p43
        %p351 = pneg %p67
        %p352 = pneg %p64
        %p353 = pneg %p88
        %p354 = pneg %p85
        %p355 = pneg %p109
        %p356 = pneg %p106
        %p357 = pneg %p130
        %p358 = pneg %p127
        %p359 = pneg %p151
        %p360 = pneg %p148
        %p361 = pneg %p172
        %p362 = pneg %p169
        %p363 = pneg %p193
        %p364 = pneg %p190
        %p365 = pneg %p214
        %p366 = pneg %p211
        %p367 = pneg %p235
        %p368 = pneg %p232
        %p369 = pneg %p256
        %p370 = pneg %p253
        %p371 = pneg %p282
        %p372 = pneg %p279
        %s373 = sand.u32 %s269, 1
        %s374 = scalar_lea.sflag [#allocation3], %s373
        %s375 = sand.u32 %s269, 1
        %s376 = smul.addr %s375, 8
        %s377 = scalar_lea.vmem [#allocation2], %s376
        %p378 = scmp.lt.s32.totalorder %s25, 1
        %s379 = scalar_select %p378, %s25, 1
        %s380 = smul.addr %s379, 8
        %s381 = scalar_lea.vmem %s0, %s380
        %v383 = vld [vmem:[%s381] sm:$0xff]
        %v384 = vpack.c.bf16 %v383, %v383
        %v385 = vld [vmem:[%s1] sm:$0xff]
        %v386 = vld [vmem:[%s1 + $0x8] sm:$0xff]
        %v387 = vld [vmem:[%s1 + $0x10] sm:$0xff]
        %v388 = vld [vmem:[%s1 + $0x18] sm:$0xff]
        %v389 = vld [vmem:[%s1 + $0x20] sm:$0xff]
        %v390 = vld [vmem:[%s1 + $0x28] sm:$0xff]
        %v391 = vld [vmem:[%s1 + $0x30] sm:$0xff]
        %v392 = vld [vmem:[%s1 + $0x38] sm:$0xff]
        %v393 = vld [vmem:[%s2] sm:$0x3]
        %v395 = vlaneseq
        %v396 = vshrl.u32 %v395, 7
        %v397 = vsub.s32 0, %v396
        %v398 = vrot.slane %v393, %v397
        %v399 = vlaneseq
        %v400 = vshrl.u32 %v399, 7
        %v401 = vsub.s32 1, %v400
        %v402 = vrot.slane %v393, %v401
        %v413 = vunpack.c.l.b16 %v385
        %v414 = vunpack.c.h.b16 %v385
        %v415 = vunpack.c.l.b16 %v386
        %v416 = vunpack.c.h.b16 %v386
        %v417 = vunpack.c.l.b16 %v387
        %v418 = vunpack.c.h.b16 %v387
        %v419 = vunpack.c.l.b16 %v388
        %v420 = vunpack.c.h.b16 %v388
        %v421 = vunpack.c.l.b16 %v389
        %v422 = vunpack.c.h.b16 %v389
        %v423 = vunpack.c.l.b16 %v390
        %v424 = vunpack.c.h.b16 %v390
        %v425 = vunpack.c.l.b16 %v391
        %v426 = vunpack.c.h.b16 %v391
        %v427 = vunpack.c.l.b16 %v392
        %v428 = vunpack.c.h.b16 %v392
        %v429 = vpack.c.b16 %v415, %v413
        %v430 = vpack.c.b16 %v416, %v414
        %v431 = vpack.c.b16 %v419, %v417
        %v432 = vpack.c.b16 %v420, %v418
        %v433 = vpack.c.b16 %v423, %v421
        %v434 = vpack.c.b16 %v424, %v422
        %v435 = vpack.c.b16 %v427, %v425
        %v436 = vpack.c.b16 %v428, %v426
        %vm445 = vcmask 523264
        %v447 = vsel %vm445, %v384, 0
        %449 = vmatprep.subr.bf16.mxu0 %v430
        %450 = vmatpush1.bf16.msra.mxu0 %v429
        %451 = vmatprep.subr.bf16.mxu0 %v432
        %452 = vmatpush1.bf16.msra.mxu0 %v431
        %453 = vmatprep.subr.bf16.mxu0 %v434
        %454 = vmatpush1.bf16.msra.mxu0 %v433
        %455 = vmatprep.subr.bf16.mxu0 %v436
        %456 = vmatpush1.bf16.msra.mxu0 %v435
        %457 = vmatprep.subr.bf16.mxu0 0
        %458 = vmatpush1.bf16.msra.mxu0 0
        %459 = vmatprep.subr.bf16.mxu0 0
        %460 = vmatpush1.bf16.msra.mxu0 0
        %461 = vmatprep.subr.bf16.mxu0 0
        %462 = vmatpush1.bf16.msra.mxu0 0
        %463 = vmatprep.subr.bf16.mxu0 0
        %464 = vmatpush1.bf16.msra.mxu0 0
        %465 = vmatprep.subr.bf16.mxu0 0
        %466 = vmatpush1.bf16.msra.mxu0 0
        %467 = vmatprep.subr.bf16.mxu0 0
        %468 = vmatpush1.bf16.msra.mxu0 0
        %469 = vmatprep.subr.bf16.mxu0 0
        %470 = vmatpush1.bf16.msra.mxu0 0
        %471 = vmatprep.subr.bf16.mxu0 0
        %472 = vmatpush1.bf16.msra.mxu0 0
        %473 = vmatprep.subr.bf16.mxu0 0
        %474 = vmatpush1.bf16.msra.mxu0 0
        %475 = vmatprep.subr.bf16.mxu0 0
        %476 = vmatpush1.bf16.msra.mxu0 0
        %477 = vmatprep.subr.bf16.mxu0 0
        %478 = vmatpush1.bf16.msra.mxu0 0
        %479 = vmatprep.subr.bf16.mxu0 0
        %480 = vmatpush1.bf16.msra.mxu0 0
        %481 = vmatprep.mubr.bf16.mxu0 0
        %482 = vmatmul.mubr.bf16.gmra.mrb[0].mxu0 %v447
        %v483 = vpop.f32.mrb[0].mxu0
        %v484 = vadd.f32 %v398, %v483
        %v485 = vpop.f32.mrb[0].mxu0
        %v486 = vadd.f32 %v402, %v485
        %v487 = vpop.f32.mrb[0].mxu0
        %v488 = vpop.f32.mrb[0].mxu0
        %489 = vdwg.mxu0
        %v490 = vsub.f32 0.0, %v486
        %v491 = vmul.f32 %v490, 1.442695
        %v492 = vpow.pop %v491
        %v493 = vadd.f32 %v492, 1.0
        %v494 = vrcp.pop %v493
        %v495 = vmul.f32 1.0, %v494
        %v496 = vmul.f32 %v486, %v495
        %v497 = vpack.c.bf16 %v496, %v496
        %v498 = vcombine.high %v484, 0.0
        %v500 = vunpack.c.l.s4 1983009808
        %v501 = vunpack.c.0.s8 %v500
        %v502 = vlaneseq
        %v503 = vshrl.u32 %v502, 7
        %v504 = vsub.s32 %v501, %v503
        %v505 = vrot.slane %v484, %v504
        %v507 = vunpack.c.l.s4 1983009808
        %v508 = vunpack.c.0.s8 %v507
        %v509 = vlaneseq
        %v510 = vshrl.u32 %v509, 7
        %v511 = vsub.s32 %v508, %v510
        %v512 = vrot.slane %v498, %v511
        %v513 = vcombine.high %v505, 0.0
        %v515 = vunpack.c.l.s4 1934713408
        %v516 = vunpack.c.0.s8 %v515
        %v517 = vlaneseq
        %v518 = vshrl.u32 %v517, 7
        %v519 = vsub.s32 %v516, %v518
        %v520 = vrot.slane %v505, %v519
        %v522 = vunpack.c.l.s4 1934713408
        %v523 = vunpack.c.0.s8 %v522
        %v524 = vlaneseq
        %v525 = vshrl.u32 %v524, 7
        %v526 = vsub.s32 %v523, %v525
        %v527 = vrot.slane %v513, %v526
        %v528 = vcombine.high %v512, 0.0
        %v530 = vunpack.c.l.s4 1934713408
        %v531 = vunpack.c.0.s8 %v530
        %v532 = vlaneseq
        %v533 = vshrl.u32 %v532, 7
        %v534 = vsub.s32 %v531, %v533
        %v535 = vrot.slane %v512, %v534
        %v537 = vunpack.c.l.s4 1934713408
        %v538 = vunpack.c.0.s8 %v537
        %v539 = vlaneseq
        %v540 = vshrl.u32 %v539, 7
        %v541 = vsub.s32 %v538, %v540
        %v542 = vrot.slane %v528, %v541
        %v543 = vcombine.high %v520, 0.0
        %v544 = vcombine.high %v527, 0.0
        %v545 = vcombine.high %v535, 0.0
        %v546 = vcombine.high %v542, 0.0
        %v547 = vld [vmem:[%s3] sm:$0xf]
        %v548 = vld [vmem:[%s3 + $0x4] sm:$0xf]
        %v549 = vld [vmem:[%s3 + $0x8] sm:$0xf]
        %v550 = vpack.c.bf16 %v520, %v520
        %v551 = vpack.c.bf16 %v543, %v543
        %v552 = vpack.c.bf16 %v527, %v527
        %v553 = vpack.c.bf16 %v544, %v544
        %v554 = vpack.c.bf16 %v535, %v535
        %v555 = vpack.c.bf16 %v545, %v545
        %v556 = vpack.c.bf16 %v542, %v542
        %v557 = vpack.c.bf16 %v546, %v546
        %v561 = vunpack.c.l.b16 %v547
        %v562 = vunpack.c.l.b16 %v548
        %v563 = vunpack.c.l.b16 %v549
        %v564 = vpack.c.b16 %v562, %v561
        %v565 = vpack.c.b16 %v563, %v563
        %v574 = vunpack.c.l.b16 %v550
        %v575 = vunpack.c.l.b16 %v551
        %v576 = vunpack.c.l.b16 %v552
        %v577 = vunpack.c.l.b16 %v553
        %v578 = vunpack.c.l.b16 %v554
        %v579 = vunpack.c.l.b16 %v555
        %v580 = vunpack.c.l.b16 %v556
        %v581 = vunpack.c.l.b16 %v557
        %v582 = vrot.slane %v575, 7
        %vm583 = vcmask 1041409
        %v584 = vsel %vm583, %v582, %v574
        %v585 = vrot.slane %v576, 6
        %vm586 = vcmask 1042434
        %v587 = vsel %vm586, %v585, %v584
        %v588 = vrot.slane %v577, 5
        %vm589 = vcmask 1043459
        %v590 = vsel %vm589, %v588, %v587
        %v591 = vrot.slane %v578, 4
        %vm592 = vcmask 1044484
        %v593 = vsel %vm592, %v591, %v590
        %v594 = vrot.slane %v579, 3
        %vm595 = vcmask 1045509
        %v596 = vsel %vm595, %v594, %v593
        %v597 = vrot.slane %v580, 2
        %vm598 = vcmask 1046534
        %v599 = vsel %vm598, %v597, %v596
        %v600 = vrot.slane %v581, 1
        %vm601 = vcmask 1047559
        %v602 = vsel %vm601, %v600, %v599
        %v603 = vpack.c.b16 %v602, %v602
        %vm604 = vcmask 64512
        %v606 = vsel %vm604, %v564, 0
        %v609 = vsel %vm604, %v565, 0
        %vm611 = vcmask 1043456
        %v613 = vsel %vm611, %v603, 0
        %615 = vmatprep.subr.bf16.mxu0 0
        %616 = vmatpush1.bf16.msra.mxu0 %v613
        %617 = vmatprep.subr.bf16.mxu0 0
        %618 = vmatpush1.bf16.msra.mxu0 0
        %619 = vmatprep.subr.bf16.mxu0 0
        %620 = vmatpush1.bf16.msra.mxu0 0
        %621 = vmatprep.subr.bf16.mxu0 0
        %622 = vmatpush1.bf16.msra.mxu0 0
        %623 = vmatprep.subr.bf16.mxu0 0
        %624 = vmatpush1.bf16.msra.mxu0 0
        %625 = vmatprep.subr.bf16.mxu0 0
        %626 = vmatpush1.bf16.msra.mxu0 0
        %627 = vmatprep.subr.bf16.mxu0 0
        %628 = vmatpush1.bf16.msra.mxu0 0
        %629 = vmatprep.subr.bf16.mxu0 0
        %630 = vmatpush1.bf16.msra.mxu0 0
        %631 = vmatprep.subr.bf16.mxu0 0
        %632 = vmatpush1.bf16.msra.mxu0 0
        %633 = vmatprep.subr.bf16.mxu0 0
        %634 = vmatpush1.bf16.msra.mxu0 0
        %635 = vmatprep.subr.bf16.mxu0 0
        %636 = vmatpush1.bf16.msra.mxu0 0
        %637 = vmatprep.subr.bf16.mxu0 0
        %638 = vmatpush1.bf16.msra.mxu0 0
        %639 = vmatprep.subr.bf16.mxu0 0
        %640 = vmatpush1.bf16.msra.mxu0 0
        %641 = vmatprep.subr.bf16.mxu0 0
        %642 = vmatpush1.bf16.msra.mxu0 0
        %643 = vmatprep.subr.bf16.mxu0 0
        %644 = vmatpush1.bf16.msra.mxu0 0
        %645 = vmatprep.subr.bf16.mxu0 0
        %646 = vmatpush1.bf16.msra.mxu0 0
        %647 = vmatprep.mubr.bf16.mxu0 0
        %648 = vmatmul.mubr.bf16.gmra.mrb[0].mxu0 %v606
        %v649 = vpop.f32.mrb[0].mxu0
        %v650 = vadd.f32 0.0, %v649
        %v651 = vpop.f32.mrb[0].mxu0
        %v652 = vpop.f32.mrb[0].mxu0
        %v653 = vadd.f32 0.0, %v652
        %v654 = vpop.f32.mrb[0].mxu0
        %655 = vmatprep.mubr.bf16.mxu0 0
        %656 = vmatmul.mubr.bf16.gmra.mrb[0].mxu0 %v609
        %v657 = vpop.f32.mrb[0].mxu0
        %v658 = vadd.f32 0.0, %v657
        %v659 = vpop.f32.mrb[0].mxu0
        %v660 = vpop.f32.mrb[0].mxu0
        %v661 = vpop.f32.mrb[0].mxu0
        %662 = vdwg.mxu0
        %664 = vrot.lane.b32.xlu0 %v650, 1
        %v665 = vpop.permute.xlu0 %664
        %vm667 = vcmask 7168
        %v668 = vsel %vm667, 0.0, %v665
        %670 = vrot.lane.b32.xlu0 %v658, 127
        %v671 = vpop.permute.xlu0 %670
        %vm673 = vcmask 1039360
        %v674 = vsel %vm673, %v671, 0.0
        %v675 = vlaneseq
        %v676 = vand.u32 %v675, 127
        %vm677 = vcmp.lt.s32.totalorder %v676, 0
        %v678 = vsub.s32 0, %v676
        %v679 = vsel %vm677, %v678, %v676
        %v680 = vshrl.u32 %v679, 7
        %v681 = vand.u32 %v679, 127
        %v682 = vsub.s32 0, %v681
        %v683 = vsel %vm677, %v682, %v681
        %vm684 = vcmp.ne.s32.totalorder %v683, 0
        %vm685 = vcmp.lt.s32.totalorder %v683, 0
        %vm686 = vmand %vm685, %vm684
        %v687 = vadd.s32 %v683, 128
        %v688 = vsel %vm686, %v687, %v683
        %vm689 = vcmp.eq.s32.totalorder %v688, 0
        %v690 = vsel %vm689, 0.0, %v668
        %v691 = vadd.f32 %v690, %v653
        %vm692 = vcmp.eq.s32.totalorder %v688, 127
        %v693 = vsel %vm692, 0.0, %v674
        %v694 = vadd.f32 %v691, %v693
        %v695 = vld [vmem:[%s4] sm:$0xff]
        %697 = vset.pattern.permute.xlu0 0
        %698 = vperm.xlu0 %697, %v695
        %v699 = vpop.permute.xlu0 %698
        %v701 = vadd.f32 %v694, %v699
        %v702 = vsub.f32 0.0, %v701
        %v703 = vmul.f32 %v702, 1.442695
        %v704 = vpow.pop %v703
        %v705 = vadd.f32 %v704, 1.0
        %v706 = vrcp.pop %v705
        %v707 = vmul.f32 1.0, %v706
        %v708 = vmul.f32 %v701, %v707
        %v710 = vcombine.high %v708, %v708
        %v712 = vunpack.c.l.s4 1966171168
        %v713 = vunpack.c.0.s8 %v712
        %v714 = vlaneseq
        %v715 = vshrl.u32 %v714, 7
        %v716 = vsub.s32 %v713, %v715
        %v717 = vrot.slane %v708, %v716
        %v719 = vunpack.c.l.s4 1966171168
        %v720 = vunpack.c.0.s8 %v719
        %v721 = vlaneseq
        %v722 = vshrl.u32 %v721, 7
        %v723 = vsub.s32 %v720, %v722
        %v724 = vrot.slane %v710, %v723
        %v725 = vcombine.high %v717, %v717
        %v726 = vcombine.high %v724, %v724
        %v728 = vunpack.c.l.s4 1966171168
        %v729 = vunpack.c.0.s8 %v728
        %v730 = vlaneseq
        %v731 = vshrl.u32 %v730, 7
        %v732 = vsub.s32 %v729, %v731
        %v733 = vrot.slane %v717, %v732
        %v735 = vunpack.c.l.s4 1966171168
        %v736 = vunpack.c.0.s8 %v735
        %v737 = vlaneseq
        %v738 = vshrl.u32 %v737, 7
        %v739 = vsub.s32 %v736, %v738
        %v740 = vrot.slane %v724, %v739
        %v742 = vunpack.c.l.s4 1966171168
        %v743 = vunpack.c.0.s8 %v742
        %v744 = vlaneseq
        %v745 = vshrl.u32 %v744, 7
        %v746 = vsub.s32 %v743, %v745
        %v747 = vrot.slane %v725, %v746
        %v749 = vunpack.c.l.s4 1966171168
        %v750 = vunpack.c.0.s8 %v749
        %v751 = vlaneseq
        %v752 = vshrl.u32 %v751, 7
        %v753 = vsub.s32 %v750, %v752
        %v754 = vrot.slane %v726, %v753
        %v755 = vcombine.high %v733, %v733
        %v756 = vcombine.high %v740, %v740
        %v757 = vcombine.high %v747, %v747
        %v758 = vcombine.high %v754, %v754
        %v759 = vcombine.low %v733, %v747
        %v760 = vcombine.low %v755, %v757
        %v761 = vcombine.low %v740, %v754
        %v762 = vcombine.low %v756, %v758
        %v764 = vunpack.c.l.s4 1966171168
        %v765 = vunpack.c.0.s8 %v764
        %v766 = vlaneseq
        %v767 = vshrl.u32 %v766, 7
        %v768 = vsub.s32 %v765, %v767
        %v769 = vrot.slane %v759, %v768
        %v771 = vunpack.c.l.s4 1966171168
        %v772 = vunpack.c.0.s8 %v771
        %v773 = vlaneseq
        %v774 = vshrl.u32 %v773, 7
        %v775 = vsub.s32 %v772, %v774
        %v776 = vrot.slane %v760, %v775
        %v778 = vunpack.c.l.s4 1966171168
        %v779 = vunpack.c.0.s8 %v778
        %v780 = vlaneseq
        %v781 = vshrl.u32 %v780, 7
        %v782 = vsub.s32 %v779, %v781
        %v783 = vrot.slane %v761, %v782
        %v785 = vunpack.c.l.s4 1966171168
        %v786 = vunpack.c.0.s8 %v785
        %v787 = vlaneseq
        %v788 = vshrl.u32 %v787, 7
        %v789 = vsub.s32 %v786, %v788
        %v790 = vrot.slane %v762, %v789
        %v791 = vcombine.low %v769, %v776
        %v792 = vcombine.low %v783, %v790
        %v794 = vunpack.c.l.s4 1966171168
        %v795 = vunpack.c.0.s8 %v794
        %v796 = vlaneseq
        %v797 = vshrl.u32 %v796, 7
        %v798 = vsub.s32 %v795, %v797
        %v799 = vrot.slane %v791, %v798
        %v801 = vunpack.c.l.s4 1966171168
        %v802 = vunpack.c.0.s8 %v801
        %v803 = vlaneseq
        %v804 = vshrl.u32 %v803, 7
        %v805 = vsub.s32 %v802, %v804
        %v806 = vrot.slane %v792, %v805
        %v807 = vcombine.low %v799, %v806
        %v809 = vpack.c.bf16 %v807, %v807
        %v810 = vld [vmem:[%s5] sm:$0xf]
        %v811 = vld [vmem:[%s5 + $0x4] sm:$0xf]
        %v812 = vld [vmem:[%s5 + $0x8] sm:$0xf]
        %v813 = vld [vmem:[%s5 + $0xc] sm:$0xf]
        %v814 = vld [vmem:[%s5 + $0x10] sm:$0xf]
        %v815 = vld [vmem:[%s5 + $0x14] sm:$0xf]
        %v816 = vld [vmem:[%s5 + $0x18] sm:$0xf]
        %v817 = vld [vmem:[%s5 + $0x1c] sm:$0xf]
        %v818 = vld [vmem:[%s5 + $0x20] sm:$0xf]
        %v819 = vld [vmem:[%s5 + $0x24] sm:$0xf]
        %v820 = vld [vmem:[%s5 + $0x28] sm:$0xf]
        %v821 = vld [vmem:[%s5 + $0x2c] sm:$0xf]
        %v822 = vld [vmem:[%s5 + $0x30] sm:$0xf]
        %v823 = vld [vmem:[%s5 + $0x34] sm:$0xf]
        %v824 = vld [vmem:[%s5 + $0x38] sm:$0xf]
        %v825 = vld [vmem:[%s5 + $0x3c] sm:$0xf]
        %v826 = vld [vmem:[%s6] sm:$0x1]
        %v828 = vlaneseq
        %v829 = vshrl.u32 %v828, 7
        %v830 = vsub.s32 0, %v829
        %v831 = vrot.slane %v826, %v830
        %v849 = vunpack.c.l.b16 %v810
        %v850 = vunpack.c.l.b16 %v811
        %v851 = vunpack.c.l.b16 %v812
        %v852 = vunpack.c.l.b16 %v813
        %v853 = vunpack.c.l.b16 %v814
        %v854 = vunpack.c.l.b16 %v815
        %v855 = vunpack.c.l.b16 %v816
        %v856 = vunpack.c.l.b16 %v817
        %v857 = vunpack.c.l.b16 %v818
        %v858 = vunpack.c.l.b16 %v819
        %v859 = vunpack.c.l.b16 %v820
        %v860 = vunpack.c.l.b16 %v821
        %v861 = vunpack.c.l.b16 %v822
        %v862 = vunpack.c.l.b16 %v823
        %v863 = vunpack.c.l.b16 %v824
        %v864 = vunpack.c.l.b16 %v825
        %v865 = vpack.c.b16 %v850, %v849
        %v866 = vpack.c.b16 %v852, %v851
        %v867 = vpack.c.b16 %v854, %v853
        %v868 = vpack.c.b16 %v856, %v855
        %v869 = vpack.c.b16 %v858, %v857
        %v870 = vpack.c.b16 %v860, %v859
        %v871 = vpack.c.b16 %v862, %v861
        %v872 = vpack.c.b16 %v864, %v863
        %881 = vmatprep.subr.bf16.mxu0 0
        %882 = vmatpush1.bf16.msra.mxu0 %v865
        %883 = vmatprep.subr.bf16.mxu0 0
        %884 = vmatpush1.bf16.msra.mxu0 %v866
        %885 = vmatprep.subr.bf16.mxu0 0
        %886 = vmatpush1.bf16.msra.mxu0 %v867
        %887 = vmatprep.subr.bf16.mxu0 0
        %888 = vmatpush1.bf16.msra.mxu0 %v868
        %889 = vmatprep.subr.bf16.mxu0 0
        %890 = vmatpush1.bf16.msra.mxu0 %v869
        %891 = vmatprep.subr.bf16.mxu0 0
        %892 = vmatpush1.bf16.msra.mxu0 %v870
        %893 = vmatprep.subr.bf16.mxu0 0
        %894 = vmatpush1.bf16.msra.mxu0 %v871
        %895 = vmatprep.subr.bf16.mxu0 0
        %896 = vmatpush1.bf16.msra.mxu0 %v872
        %897 = vmatprep.subr.bf16.mxu0 0
        %898 = vmatpush1.bf16.msra.mxu0 0
        %899 = vmatprep.subr.bf16.mxu0 0
        %900 = vmatpush1.bf16.msra.mxu0 0
        %901 = vmatprep.subr.bf16.mxu0 0
        %902 = vmatpush1.bf16.msra.mxu0 0
        %903 = vmatprep.subr.bf16.mxu0 0
        %904 = vmatpush1.bf16.msra.mxu0 0
        %905 = vmatprep.subr.bf16.mxu0 0
        %906 = vmatpush1.bf16.msra.mxu0 0
        %907 = vmatprep.subr.bf16.mxu0 0
        %908 = vmatpush1.bf16.msra.mxu0 0
        %909 = vmatprep.subr.bf16.mxu0 0
        %910 = vmatpush1.bf16.msra.mxu0 0
        %911 = vmatprep.subr.bf16.mxu0 0
        %912 = vmatpush1.bf16.msra.mxu0 0
        %913 = vmatprep.mubr.bf16.mxu0 0
        %914 = vmatmul.mubr.bf16.gmra.mrb[0].mxu0 %v809
        %v915 = vpop.f32.mrb[0].mxu0
        %v916 = vadd.f32 %v831, %v915
        %v917 = vpop.f32.mrb[0].mxu0
        %v918 = vpop.f32.mrb[0].mxu0
        %v919 = vpop.f32.mrb[0].mxu0
        %920 = vdwg.mxu0
        %v921 = vpack.c.bf16 %v916, %v916
        %v922 = vld [vmem:[%s7] sm:$0xff]
        %v923 = vld [vmem:[%s7 + $0x8] sm:$0xff]
        %v924 = vld [vmem:[%s7 + $0x10] sm:$0xff]
        %v925 = vld [vmem:[%s7 + $0x18] sm:$0xff]
        %v926 = vld [vmem:[%s7 + $0x20] sm:$0xff]
        %v927 = vld [vmem:[%s7 + $0x28] sm:$0xff]
        %v928 = vld [vmem:[%s7 + $0x30] sm:$0xff]
        %v929 = vld [vmem:[%s7 + $0x38] sm:$0xff]
        %v930 = vld [vmem:[%s7 + $0x40] sm:$0xff]
        %v931 = vld [vmem:[%s7 + $0x48] sm:$0xff]
        %v932 = vld [vmem:[%s7 + $0x50] sm:$0xff]
        %v933 = vld [vmem:[%s7 + $0x58] sm:$0xff]
        %v934 = vld [vmem:[%s7 + $0x60] sm:$0xff]
        %v935 = vld [vmem:[%s7 + $0x68] sm:$0xff]
        %v936 = vld [vmem:[%s7 + $0x70] sm:$0xff]
        %v937 = vld [vmem:[%s7 + $0x78] sm:$0xff]
        %v938 = vld [vmem:[%s8] sm:$0x3]
        %v940 = vlaneseq
        %v941 = vshrl.u32 %v940, 7
        %v942 = vsub.s32 0, %v941
        %v943 = vrot.slane %v938, %v942
        %v944 = vlaneseq
        %v945 = vshrl.u32 %v944, 7
        %v946 = vsub.s32 1, %v945
        %v947 = vrot.slane %v938, %v946
        %v966 = vunpack.c.l.b16 %v922
        %v967 = vunpack.c.h.b16 %v922
        %v968 = vunpack.c.l.b16 %v923
        %v969 = vunpack.c.h.b16 %v923
        %v970 = vunpack.c.l.b16 %v924
        %v971 = vunpack.c.h.b16 %v924
        %v972 = vunpack.c.l.b16 %v925
        %v973 = vunpack.c.h.b16 %v925
        %v974 = vunpack.c.l.b16 %v926
        %v975 = vunpack.c.h.b16 %v926
        %v976 = vunpack.c.l.b16 %v927
        %v977 = vunpack.c.h.b16 %v927
        %v978 = vunpack.c.l.b16 %v928
        %v979 = vunpack.c.h.b16 %v928
        %v980 = vunpack.c.l.b16 %v929
        %v981 = vunpack.c.h.b16 %v929
        %v982 = vunpack.c.l.b16 %v930
        %v983 = vunpack.c.h.b16 %v930
        %v984 = vunpack.c.l.b16 %v931
        %v985 = vunpack.c.h.b16 %v931
        %v986 = vunpack.c.l.b16 %v932
        %v987 = vunpack.c.h.b16 %v932
        %v988 = vunpack.c.l.b16 %v933
        %v989 = vunpack.c.h.b16 %v933
        %v990 = vunpack.c.l.b16 %v934
        %v991 = vunpack.c.h.b16 %v934
        %v992 = vunpack.c.l.b16 %v935
        %v993 = vunpack.c.h.b16 %v935
        %v994 = vunpack.c.l.b16 %v936
        %v995 = vunpack.c.h.b16 %v936
        %v996 = vunpack.c.l.b16 %v937
        %v997 = vunpack.c.h.b16 %v937
        %v998 = vpack.c.b16 %v968, %v966
        %v999 = vpack.c.b16 %v969, %v967
        %v1000 = vpack.c.b16 %v972, %v970
        %v1001 = vpack.c.b16 %v973, %v971
        %v1002 = vpack.c.b16 %v976, %v974
        %v1003 = vpack.c.b16 %v977, %v975
        %v1004 = vpack.c.b16 %v980, %v978
        %v1005 = vpack.c.b16 %v981, %v979
        %v1006 = vpack.c.b16 %v984, %v982
        %v1007 = vpack.c.b16 %v985, %v983
        %v1008 = vpack.c.b16 %v988, %v986
        %v1009 = vpack.c.b16 %v989, %v987
        %v1010 = vpack.c.b16 %v992, %v990
        %v1011 = vpack.c.b16 %v993, %v991
        %v1012 = vpack.c.b16 %v996, %v994
        %v1013 = vpack.c.b16 %v997, %v995
        %1030 = vmatprep.subr.bf16.mxu0 %v999
        %1031 = vmatpush1.bf16.msra.mxu0 %v998
        %1032 = vmatprep.subr.bf16.mxu0 %v1001
        %1033 = vmatpush1.bf16.msra.mxu0 %v1000
        %1034 = vmatprep.subr.bf16.mxu0 %v1003
        %1035 = vmatpush1.bf16.msra.mxu0 %v1002
        %1036 = vmatprep.subr.bf16.mxu0 %v1005
        %1037 = vmatpush1.bf16.msra.mxu0 %v1004
        %1038 = vmatprep.subr.bf16.mxu0 %v1007
        %1039 = vmatpush1.bf16.msra.mxu0 %v1006
        %1040 = vmatprep.subr.bf16.mxu0 %v1009
        %1041 = vmatpush1.bf16.msra.mxu0 %v1008
        %1042 = vmatprep.subr.bf16.mxu0 %v1011
        %1043 = vmatpush1.bf16.msra.mxu0 %v1010
        %1044 = vmatprep.subr.bf16.mxu0 %v1013
        %1045 = vmatpush1.bf16.msra.mxu0 %v1012
        %1046 = vmatprep.subr.bf16.mxu0 0
        %1047 = vmatpush1.bf16.msra.mxu0 0
        %1048 = vmatprep.subr.bf16.mxu0 0
        %1049 = vmatpush1.bf16.msra.mxu0 0
        %1050 = vmatprep.subr.bf16.mxu0 0
        %1051 = vmatpush1.bf16.msra.mxu0 0
        %1052 = vmatprep.subr.bf16.mxu0 0
        %1053 = vmatpush1.bf16.msra.mxu0 0
        %1054 = vmatprep.subr.bf16.mxu0 0
        %1055 = vmatpush1.bf16.msra.mxu0 0
        %1056 = vmatprep.subr.bf16.mxu0 0
        %1057 = vmatpush1.bf16.msra.mxu0 0
        %1058 = vmatprep.subr.bf16.mxu0 0
        %1059 = vmatpush1.bf16.msra.mxu0 0
        %1060 = vmatprep.subr.bf16.mxu0 0
        %1061 = vmatpush1.bf16.msra.mxu0 0
        %1062 = vmatprep.mubr.bf16.mxu0 0
        %1063 = vmatmul.mubr.bf16.gmra.mrb[0].mxu0 %v921
        %v1064 = vpop.f32.mrb[0].mxu0
        %v1065 = vadd.f32 %v943, %v1064
        %v1066 = vpop.f32.mrb[0].mxu0
        %v1067 = vadd.f32 %v947, %v1066
        %v1068 = vpop.f32.mrb[0].mxu0
        %v1069 = vpop.f32.mrb[0].mxu0
        %1070 = vdwg.mxu0
        %v1071 = vmax.f32 %v1065, 0.0
        %v1072 = vand.u32 2147483647, %v1065
        %v1073 = vsub.f32 0.0, %v1072
        %v1074 = vmul.f32 %v1073, 1.442695
        %v1075 = vpow.pop %v1074
        %v1076 = vadd.f32 %v1075, 1.0
        %v1077 = vlog2.pop %v1076
        %v1078 = vmul.f32 %v1077, 0.6931472
        %v1079 = vadd.f32 %v1071, %v1078
        %1081 = vrot.lane.b32.xlu0 %v1067, 112
        %v1082 = vpop.permute.xlu0 %1081
        %v1084 = vmul.f32 %v1067, %v1082
        %vm1085 = vcmask 130048
        %v1086 = vsel %vm1085, %v1084, 0.0
        %1087 = vadd.xlane.f32.xlu0 %v1086
        %v1088 = vpop.xlane.xlu0 %1087
        %v1089 = vmul.f32 %v916, %v1079
        %v1090 = vmul.f32 %v1089, %v1088
        %v1091 = vsub.f32 0.0, %v1090
        %v1092 = vmul.f32 %v1091, 1.442695
        %v1093 = vpow.pop %v1092
        %v1094 = vadd.f32 %v1093, 1.0
        %v1095 = vrcp.pop %v1094
        %v1096 = vmul.f32 1.0, %v1095
        %v1097 = vmul.f32 %v1090, %v1096
        %v1098 = vunpack.c.l.bf16 %v497
        %v1099 = vmul.f32 %v1097, %v1098
        %v1100 = vpack.c.bf16 %v1099, %v1099
        %v1101 = vld [vmem:[%s9] sm:$0xf]
        %v1102 = vld [vmem:[%s9 + $0x4] sm:$0xf]
        %v1103 = vld [vmem:[%s9 + $0x8] sm:$0xf]
        %v1104 = vld [vmem:[%s9 + $0xc] sm:$0xf]
        %v1105 = vld [vmem:[%s9 + $0x10] sm:$0xf]
        %v1106 = vld [vmem:[%s9 + $0x14] sm:$0xf]
        %v1107 = vld [vmem:[%s9 + $0x18] sm:$0xf]
        %v1108 = vld [vmem:[%s9 + $0x1c] sm:$0xf]
        %v1109 = vld [vmem:[%s9 + $0x20] sm:$0xf]
        %v1110 = vld [vmem:[%s9 + $0x24] sm:$0xf]
        %v1111 = vld [vmem:[%s9 + $0x28] sm:$0xf]
        %v1112 = vld [vmem:[%s9 + $0x2c] sm:$0xf]
        %v1113 = vld [vmem:[%s9 + $0x30] sm:$0xf]
        %v1114 = vld [vmem:[%s9 + $0x34] sm:$0xf]
        %v1115 = vld [vmem:[%s9 + $0x38] sm:$0xf]
        %v1116 = vld [vmem:[%s9 + $0x3c] sm:$0xf]
        %v1117 = vld [vmem:[%s10] sm:$0x1]
        %v1119 = vlaneseq
        %v1120 = vshrl.u32 %v1119, 7
        %v1121 = vsub.s32 0, %v1120
        %v1122 = vrot.slane %v1117, %v1121
        %v1140 = vunpack.c.l.b16 %v1101
        %v1141 = vunpack.c.l.b16 %v1102
        %v1142 = vunpack.c.l.b16 %v1103
        %v1143 = vunpack.c.l.b16 %v1104
        %v1144 = vunpack.c.l.b16 %v1105
        %v1145 = vunpack.c.l.b16 %v1106
        %v1146 = vunpack.c.l.b16 %v1107
        %v1147 = vunpack.c.l.b16 %v1108
        %v1148 = vunpack.c.l.b16 %v1109
        %v1149 = vunpack.c.l.b16 %v1110
        %v1150 = vunpack.c.l.b16 %v1111
        %v1151 = vunpack.c.l.b16 %v1112
        %v1152 = vunpack.c.l.b16 %v1113
        %v1153 = vunpack.c.l.b16 %v1114
        %v1154 = vunpack.c.l.b16 %v1115
        %v1155 = vunpack.c.l.b16 %v1116
        %v1156 = vpack.c.b16 %v1141, %v1140
        %v1157 = vpack.c.b16 %v1143, %v1142
        %v1158 = vpack.c.b16 %v1145, %v1144
        %v1159 = vpack.c.b16 %v1147, %v1146
        %v1160 = vpack.c.b16 %v1149, %v1148
        %v1161 = vpack.c.b16 %v1151, %v1150
        %v1162 = vpack.c.b16 %v1153, %v1152
        %v1163 = vpack.c.b16 %v1155, %v1154
        %1172 = vmatprep.subr.bf16.mxu0 0
        %1173 = vmatpush1.bf16.msra.mxu0 %v1156
        %1174 = vmatprep.subr.bf16.mxu0 0
        %1175 = vmatpush1.bf16.msra.mxu0 %v1157
        %1176 = vmatprep.subr.bf16.mxu0 0
        %1177 = vmatpush1.bf16.msra.mxu0 %v1158
        %1178 = vmatprep.subr.bf16.mxu0 0
        %1179 = vmatpush1.bf16.msra.mxu0 %v1159
        %1180 = vmatprep.subr.bf16.mxu0 0
        %1181 = vmatpush1.bf16.msra.mxu0 %v1160
        %1182 = vmatprep.subr.bf16.mxu0 0
        %1183 = vmatpush1.bf16.msra.mxu0 %v1161
        %1184 = vmatprep.subr.bf16.mxu0 0
        %1185 = vmatpush1.bf16.msra.mxu0 %v1162
        %1186 = vmatprep.subr.bf16.mxu0 0
        %1187 = vmatpush1.bf16.msra.mxu0 %v1163
        %1188 = vmatprep.subr.bf16.mxu0 0
        %1189 = vmatpush1.bf16.msra.mxu0 0
        %1190 = vmatprep.subr.bf16.mxu0 0
        %1191 = vmatpush1.bf16.msra.mxu0 0
        %1192 = vmatprep.subr.bf16.mxu0 0
        %1193 = vmatpush1.bf16.msra.mxu0 0
        %1194 = vmatprep.subr.bf16.mxu0 0
        %1195 = vmatpush1.bf16.msra.mxu0 0
        %1196 = vmatprep.subr.bf16.mxu0 0
        %1197 = vmatpush1.bf16.msra.mxu0 0
        %1198 = vmatprep.subr.bf16.mxu0 0
        %1199 = vmatpush1.bf16.msra.mxu0 0
        %1200 = vmatprep.subr.bf16.mxu0 0
        %1201 = vmatpush1.bf16.msra.mxu0 0
        %1202 = vmatprep.subr.bf16.mxu0 0
        %1203 = vmatpush1.bf16.msra.mxu0 0
        %1204 = vmatprep.mubr.bf16.mxu0 0
        %1205 = vmatmul.mubr.bf16.gmra.mrb[0].mxu0 %v1100
        %v1206 = vpop.f32.mrb[0].mxu0
        %v1207 = vadd.f32 %v1122, %v1206
        %v1208 = vpop.f32.mrb[0].mxu0
        %v1209 = vpop.f32.mrb[0].mxu0
        %v1210 = vpop.f32.mrb[0].mxu0
        %1211 = vdwg.mxu0
        %1212 = vst [vmem:[%s377] sm:$0xff] %v1207
        %s1213 = sand.u32 %s269, 1
        %s1214 = scalar_lea.sflag [#allocation3], %s1213
        %s1215 = sand.u32 %s269, 1
        %s1216 = smul.addr %s1215, 8
        %s1217 = scalar_lea.vmem [#allocation2], %s1216
        // Predicated region
        $region65: #{tpu_custom_call.1} parent=63 // pred_check
          %p1218 = pneg %p279
        $region66: #{tpu_custom_call.1} parent=63 // pred_check_branch
          %1220 = sbr.rel (%p1218) target = $region68
        $region67: #{tpu_custom_call.1} parent=63 // pred_region
          %s1222 = ssub.s32 128, 128
          %1223 = vsyncadd %s1214, %s1222
          %s1224 = smul.addr %s25, 128
          %s1225 = scalar_lea.hbm %s11, %s1224
          %s1227 = sshll.u32 %s1217, 4
          %s1228 = int_to_ptr.vmem [resolvable:$true] %s1227
          %1230 = dma.vmem_to_hbm [thread:$0]  %s1228, 128, %s1225, %s1214
        $region68: #{tpu_custom_call.1} parent=63 // pred_fallthru
          _
      $region64: #{tpu_custom_call.1} parent=5 // pred_fallthru
        _
      %p1231 = scmp.le.s32.totalorder 2, %s20
      // Predicated region
      $region69: #{tpu_custom_call.1} parent=5 // pred_check
        %p1232 = pneg %p1231
      $region70: #{tpu_custom_call.1} parent=5 // pred_check_branch
        %1234 = sbr.rel (%p1232) target = $region72
      $region71: #{tpu_custom_call.1} parent=5 // pred_region
        %s1235 = ssub.s32 %s20, 2
        // Predicated region
        $region73: #{tpu_custom_call.1} parent=71 // pred_check
          %p1236 = pneg %p285
        $region74: #{tpu_custom_call.1} parent=71 // pred_check_branch
          %1238 = sbr.rel (%p1236) target = $region76
        $region75: #{tpu_custom_call.1} parent=71 // pred_region
          %s1239 = sand.u32 %s270, 1
          %s1240 = scalar_lea.sflag [#allocation3], %s1239
          %s1241 = sand.u32 %s270, 1
          %s1242 = smul.addr %s1241, 8
          %s1243 = scalar_lea.vmem [#allocation2], %s1242
          %1244 = dma.done %s1240, 128
        $region76: #{tpu_custom_call.1} parent=71 // pred_fallthru
          _
      $region72: #{tpu_custom_call.1} parent=5 // pred_fallthru
        _
    $region6: #{tpu_custom_call.1} parent=1 // loop_footer
      %s24 = sadd.s32 1, %s20
    $region7: #{tpu_custom_call.1} parent=1 // loop_footer_branch
      %19 = sbr.rel target = $region3
    $region8: #{tpu_custom_call.1} parent=1 // loop_exit
      _
    %1245 = vsyncpa [#allocation3], 1
    %s1246 = scalar_lea.sflag [#allocation3], 1
    %1247 = vsyncpa %s1246, 1

// kernel: tpu_custom_call.1
$region0: #{tpu_custom_call.1}
  #allocation0 [shape = 'u32[]', space=smem, size = 0x4, offset = 0x4, fixed_abs, tag = 'smem constant byte address 0x4 - core index']
  #allocation1 [shape = 'u32[144,128]{1,0:T(1,128)}', space=vmem, size = 0x12000, scoped, tag = 'internal scratch']
  %s0 = inlined_call_operand.vmem [shape: f32[2,8,64], index: 0, kind: input, shape index: {}]
  %s1 = inlined_call_operand.vmem [shape: bf16[64,256], index: 1, kind: input, shape index: {}]
  %s2 = inlined_call_operand.vmem [shape: f32[1,256], index: 2, kind: input, shape index: {}]
  %s3 = inlined_call_operand.vmem [shape: bf16[24,8], index: 3, kind: input, shape index: {}]
  %s4 = inlined_call_operand.vmem [shape: f32[8,1], index: 4, kind: input, shape index: {}]
  %s5 = inlined_call_operand.vmem [shape: bf16[128,128], index: 5, kind: input, shape index: {}]
  %s6 = inlined_call_operand.vmem [shape: f32[1,128], index: 6, kind: input, shape index: {}]
  %s7 = inlined_call_operand.vmem [shape: bf16[128,160], index: 7, kind: input, shape index: {}]
  %s8 = inlined_call_operand.vmem [shape: f32[1,160], index: 8, kind: input, shape index: {}]
  %s9 = inlined_call_operand.vmem [shape: bf16[128,128], index: 9, kind: input, shape index: {}]
  %s10 = inlined_call_operand.vmem [shape: f32[1,128], index: 10, kind: input, shape index: {}]
  %s11 = inlined_call_operand.hbm [shape: f32[2,8,128], index: 11, kind: output, shape index: {}]
  %s12 = sld [smem:[#allocation0]]
  $region77: #{tpu_custom_call.1} parent=0
    _
  %s14 = ssub.s32 1, %s12
  %s15 = scalar_select 0, %s14, %s12
  $region1: #{tpu_custom_call.1} parent=0
    #allocation2 [shape = 'u8[8192]{0}', space=vmem, size = 0x2000, scoped, tag = 'output window, operand 0']
    #allocation3 [shape = 's32[2]{0}', space=sflag, size = 0x8, scoped, tag = 'scoped memory for tpu_custom_call.1']
    %16 = vsyncpa [#allocation3], 0
    %s17 = scalar_lea.sflag [#allocation3], 1
    %18 = vsyncpa %s17, 0
    loop: start=0, step=1, limit=4
    $region2: #{tpu_custom_call.1} parent=1 // loop_pre_header
      _
    $region3: #{tpu_custom_call.1} parent=1 // loop_header
      %s20 = sphi 0, %s24
      %p21 = scmp.ge.s32.totalorder %s20, 4
      %s30 = sphi 0, %s32
      %s33 = sphi 0, %s30
      %s34 = sphi 0, %s33
      %s50 = sphi 0, %s34
      %s54 = sphi 0, %s54
      %s56 = sphi 0, %s54
      %s57 = sphi 0, %s56
      %s71 = sphi 0, %s57
      %s75 = sphi 0, %s75
      %s77 = sphi 0, %s75
      %s78 = sphi 0, %s77
      %s92 = sphi 0, %s78
      %s96 = sphi 0, %s96
      %s98 = sphi 0, %s96
      %s99 = sphi 0, %s98
      %s113 = sphi 0, %s99
      %s117 = sphi 0, %s117
      %s119 = sphi 0, %s117
      %s120 = sphi 0, %s119
      %s134 = sphi 0, %s120
      %s138 = sphi 0, %s138
      %s140 = sphi 0, %s138
      %s141 = sphi 0, %s140
      %s155 = sphi 0, %s141
      %s159 = sphi 0, %s159
      %s161 = sphi 0, %s159
      %s162 = sphi 0, %s161
      %s176 = sphi 0, %s162
      %s180 = sphi 0, %s180
      %s182 = sphi 0, %s180
      %s183 = sphi 0, %s182
      %s197 = sphi 0, %s183
      %s201 = sphi 0, %s201
      %s203 = sphi 0, %s201
      %s204 = sphi 0, %s203
      %s218 = sphi 0, %s204
      %s222 = sphi 0, %s222
      %s224 = sphi 0, %s222
      %s225 = sphi 0, %s224
      %s239 = sphi 0, %s225
      %s243 = sphi 0, %s243
      %s245 = sphi 0, %s243
      %s246 = sphi 0, %s245
      %s260 = sphi 0, %s246
      %s266 = sphi 0, %s268
      %s269 = sphi 0, %s266
      %s270 = sphi 0, %s269
      %s286 = sphi 0, %s270
    $region4: #{tpu_custom_call.1} parent=1 // loop_header_branch
      %23 = sbr.rel (%p21) target = $region8
    $region5: #{tpu_custom_call.1} parent=1 // loop_body
      %s25 = ssub.s32 %s20, 1
      %s26 = ssub.s32 %s20, 2
      %s27 = sadd.s32 %s20, 1
      %s28 = ssub.s32 %s20, %s27
      %p29 = scmp.eq.s32.totalorder %s28, 0
      %s31 = sadd.s32 %s30, 1
      %s32 = scalar_select %p29, %s30, %s31
      %p35 = pneg %p29
      %p36 = scmp.eq.s32.totalorder %s20, 1
      %p37 = por %p35, %p36
      %p38 = scmp.ne.s32.totalorder %s30, %s33
      %p39 = scmp.eq.s32.totalorder %s20, 0
      %p40 = por %p38, %p39
      %p41 = scmp.ne.s32.totalorder %s30, %s33
      %p42 = scmp.eq.s32.totalorder %s25, 1
      %p43 = por %p41, %p42
      %p44 = scmp.ne.s32.totalorder %s33, %s34
      %p45 = scmp.eq.s32.totalorder %s25, 0
      %p46 = por %p44, %p45
      %p47 = scmp.ne.s32.totalorder %s33, %s34
      %p48 = scmp.eq.s32.totalorder %s26, 1
      %p49 = por %p47, %p48
      %p51 = scmp.ne.s32.totalorder %s34, %s50
      %p52 = scmp.eq.s32.totalorder %s26, 0
      %p53 = por %p51, %p52
      %s55 = sadd.s32 %s54, 1
      %p58 = scmp.eq.s32.totalorder %s20, 1
      %p59 = scmp.ne.s32.totalorder %s54, %s56
      %p60 = scmp.eq.s32.totalorder %s20, 0
      %p61 = por %p59, %p60
      %p62 = scmp.ne.s32.totalorder %s54, %s56
      %p63 = scmp.eq.s32.totalorder %s25, 1
      %p64 = por %p62, %p63
      %p65 = scmp.ne.s32.totalorder %s56, %s57
      %p66 = scmp.eq.s32.totalorder %s25, 0
      %p67 = por %p65, %p66
      %p68 = scmp.ne.s32.totalorder %s56, %s57
      %p69 = scmp.eq.s32.totalorder %s26, 1
      %p70 = por %p68, %p69
      %p72 = scmp.ne.s32.totalorder %s57, %s71
      %p73 = scmp.eq.s32.totalorder %s26, 0
      %p74 = por %p72, %p73
      %s76 = sadd.s32 %s75, 1
      %p79 = scmp.eq.s32.totalorder %s20, 1
      %p80 = scmp.ne.s32.totalorder %s75, %s77
      %p81 = scmp.eq.s32.totalorder %s20, 0
      %p82 = por %p80, %p81
      %p83 = scmp.ne.s32.totalorder %s75, %s77
      %p84 = scmp.eq.s32.totalorder %s25, 1
      %p85 = por %p83, %p84
      %p86 = scmp.ne.s32.totalorder %s77, %s78
      %p87 = scmp.eq.s32.totalorder %s25, 0
      %p88 = por %p86, %p87
      %p89 = scmp.ne.s32.totalorder %s77, %s78
      %p90 = scmp.eq.s32.totalorder %s26, 1
      %p91 = por %p89, %p90
      %p93 = scmp.ne.s32.totalorder %s78, %s92
      %p94 = scmp.eq.s32.totalorder %s26, 0
      %p95 = por %p93, %p94
      %s97 = sadd.s32 %s96, 1
      %p100 = scmp.eq.s32.totalorder %s20, 1
      %p101 = scmp.ne.s32.totalorder %s96, %s98
      %p102 = scmp.eq.s32.totalorder %s20, 0
      %p103 = por %p101, %p102
      %p104 = scmp.ne.s32.totalorder %s96, %s98
      %p105 = scmp.eq.s32.totalorder %s25, 1
      %p106 = por %p104, %p105
      %p107 = scmp.ne.s32.totalorder %s98, %s99
      %p108 = scmp.eq.s32.totalorder %s25, 0
      %p109 = por %p107, %p108
      %p110 = scmp.ne.s32.totalorder %s98, %s99
      %p111 = scmp.eq.s32.totalorder %s26, 1
      %p112 = por %p110, %p111
      %p114 = scmp.ne.s32.totalorder %s99, %s113
      %p115 = scmp.eq.s32.totalorder %s26, 0
      %p116 = por %p114, %p115
      %s118 = sadd.s32 %s117, 1
      %p121 = scmp.eq.s32.totalorder %s20, 1
      %p122 = scmp.ne.s32.totalorder %s117, %s119
      %p123 = scmp.eq.s32.totalorder %s20, 0
      %p124 = por %p122, %p123
      %p125 = scmp.ne.s32.totalorder %s117, %s119
      %p126 = scmp.eq.s32.totalorder %s25, 1
      %p127 = por %p125, %p126
      %p128 = scmp.ne.s32.totalorder %s119, %s120
      %p129 = scmp.eq.s32.totalorder %s25, 0
      %p130 = por %p128, %p129
      %p131 = scmp.ne.s32.totalorder %s119, %s120
      %p132 = scmp.eq.s32.totalorder %s26, 1
      %p133 = por %p131, %p132
      %p135 = scmp.ne.s32.totalorder %s120, %s134
      %p136 = scmp.eq.s32.totalorder %s26, 0
      %p137 = por %p135, %p136
      %s139 = sadd.s32 %s138, 1
      %p142 = scmp.eq.s32.totalorder %s20, 1
      %p143 = scmp.ne.s32.totalorder %s138, %s140
      %p144 = scmp.eq.s32.totalorder %s20, 0
      %p145 = por %p143, %p144
      %p146 = scmp.ne.s32.totalorder %s138, %s140
      %p147 = scmp.eq.s32.totalorder %s25, 1
      %p148 = por %p146, %p147
      %p149 = scmp.ne.s32.totalorder %s140, %s141
      %p150 = scmp.eq.s32.totalorder %s25, 0
      %p151 = por %p149, %p150
      %p152 = scmp.ne.s32.totalorder %s140, %s141
      %p153 = scmp.eq.s32.totalorder %s26, 1
      %p154 = por %p152, %p153
      %p156 = scmp.ne.s32.totalorder %s141, %s155
      %p157 = scmp.eq.s32.totalorder %s26, 0
      %p158 = por %p156, %p157
      %s160 = sadd.s32 %s159, 1
      %p163 = scmp.eq.s32.totalorder %s20, 1
      %p164 = scmp.ne.s32.totalorder %s159, %s161
      %p165 = scmp.eq.s32.totalorder %s20, 0
      %p166 = por %p164, %p165
      %p167 = scmp.ne.s32.totalorder %s159, %s161
      %p168 = scmp.eq.s32.totalorder %s25, 1
      %p169 = por %p167, %p168
      %p170 = scmp.ne.s32.totalorder %s161, %s162
      %p171 = scmp.eq.s32.totalorder %s25, 0
      %p172 = por %p170, %p171
      %p173 = scmp.ne.s32.totalorder %s161, %s162
      %p174 = scmp.eq.s32.totalorder %s26, 1
      %p175 = por %p173, %p174
      %p177 = scmp.ne.s32.totalorder %s162, %s176
      %p178 = scmp.eq.s32.totalorder %s26, 0
      %p179 = por %p177, %p178
      %s181 = sadd.s32 %s180, 1
      %p184 = scmp.eq.s32.totalorder %s20, 1
      %p185 = scmp.ne.s32.totalorder %s180, %s182
      %p186 = scmp.eq.s32.totalorder %s20, 0
      %p187 = por %p185, %p186
      %p188 = scmp.ne.s32.totalorder %s180, %s182
      %p189 = scmp.eq.s32.totalorder %s25, 1
      %p190 = por %p188, %p189
      %p191 = scmp.ne.s32.totalorder %s182, %s183
      %p192 = scmp.eq.s32.totalorder %s25, 0
      %p193 = por %p191, %p192
      %p194 = scmp.ne.s32.totalorder %s182, %s183
      %p195 = scmp.eq.s32.totalorder %s26, 1
      %p196 = por %p194, %p195
      %p198 = scmp.ne.s32.totalorder %s183, %s197
      %p199 = scmp.eq.s32.totalorder %s26, 0
      %p200 = por %p198, %p199
      %s202 = sadd.s32 %s201, 1
      %p205 = scmp.eq.s32.totalorder %s20, 1
      %p206 = scmp.ne.s32.totalorder %s201, %s203
      %p207 = scmp.eq.s32.totalorder %s20, 0
      %p208 = por %p206, %p207
      %p209 = scmp.ne.s32.totalorder %s201, %s203
      %p210 = scmp.eq.s32.totalorder %s25, 1
      %p211 = por %p209, %p210
      %p212 = scmp.ne.s32.totalorder %s203, %s204
      %p213 = scmp.eq.s32.totalorder %s25, 0
      %p214 = por %p212, %p213
      %p215 = scmp.ne.s32.totalorder %s203, %s204
      %p216 = scmp.eq.s32.totalorder %s26, 1
      %p217 = por %p215, %p216
      %p219 = scmp.ne.s32.totalorder %s204, %s218
      %p220 = scmp.eq.s32.totalorder %s26, 0
      %p221 = por %p219, %p220
      %s223 = sadd.s32 %s222, 1
      %p226 = scmp.eq.s32.totalorder %s20, 1
      %p227 = scmp.ne.s32.totalorder %s222, %s224
      %p228 = scmp.eq.s32.totalorder %s20, 0
      %p229 = por %p227, %p228
      %p230 = scmp.ne.s32.totalorder %s222, %s224
      %p231 = scmp.eq.s32.totalorder %s25, 1
      %p232 = por %p230, %p231
      %p233 = scmp.ne.s32.totalorder %s224, %s225
      %p234 = scmp.eq.s32.totalorder %s25, 0
      %p235 = por %p233, %p234
      %p236 = scmp.ne.s32.totalorder %s224, %s225
      %p237 = scmp.eq.s32.totalorder %s26, 1
      %p238 = por %p236, %p237
      %p240 = scmp.ne.s32.totalorder %s225, %s239
      %p241 = scmp.eq.s32.totalorder %s26, 0
      %p242 = por %p240, %p241
      %s244 = sadd.s32 %s243, 1
      %p247 = scmp.eq.s32.totalorder %s20, 1
      %p248 = scmp.ne.s32.totalorder %s243, %s245
      %p249 = scmp.eq.s32.totalorder %s20, 0
      %p250 = por %p248, %p249
      %p251 = scmp.ne.s32.totalorder %s243, %s245
      %p252 = scmp.eq.s32.totalorder %s25, 1
      %p253 = por %p251, %p252
      %p254 = scmp.ne.s32.totalorder %s245, %s246
      %p255 = scmp.eq.s32.totalorder %s25, 0
      %p256 = por %p254, %p255
      %p257 = scmp.ne.s32.totalorder %s245, %s246
      %p258 = scmp.eq.s32.totalorder %s26, 1
      %p259 = por %p257, %p258
      %p261 = scmp.ne.s32.totalorder %s246, %s260
      %p262 = scmp.eq.s32.totalorder %s26, 0
      %p263 = por %p261, %p262
      %s264 = ssub.s32 %s20, %s27
      %p265 = scmp.eq.s32.totalorder %s264, 0
      %s267 = sadd.s32 %s266, 1
      %s268 = scalar_select %p265, %s266, %s267
      %p271 = pneg %p265
      %p272 = scmp.eq.s32.totalorder %s20, 1
      %p273 = por %p271, %p272
      %p274 = scmp.ne.s32.totalorder %s266, %s269
      %p275 = scmp.eq.s32.totalorder %s20, 0
      %p276 = por %p274, %p275
      %p277 = scmp.ne.s32.totalorder %s266, %s269
      %p278 = scmp.eq.s32.totalorder %s25, 1
      %p279 = por %p277, %p278
      %p280 = scmp.ne.s32.totalorder %s269, %s270
      %p281 = scmp.eq.s32.totalorder %s25, 0
      %p282 = por %p280, %p281
      %p283 = scmp.ne.s32.totalorder %s269, %s270
      %p284 = scmp.eq.s32.totalorder %s26, 1
      %p285 = por %p283, %p284
      %p287 = scmp.ne.s32.totalorder %s270, %s286
      %p288 = scmp.eq.s32.totalorder %s26, 0
      %p289 = por %p287, %p288
      %p290 = scmp.le.s32.totalorder 1, %s20
      %p291 = scmp.lt.s32.totalorder %s20, 3
      %p292 = pnand %p290, %p291
      %p293 = pneg %p292
      // Predicated region
      $region9: #{tpu_custom_call.1} parent=5 // pred_check
        _
      $region10: #{tpu_custom_call.1} parent=5 // pred_check_branch
        %295 = sbr.rel (%p292) target = $region12
      $region11: #{tpu_custom_call.1} parent=5 // pred_region
        %s296 = ssub.s32 %s20, 1
        // Predicated region
        $region13: #{tpu_custom_call.1} parent=11 // pred_check
          %p297 = pneg %p67
        $region14: #{tpu_custom_call.1} parent=11 // pred_check_branch
          %299 = sbr.rel (%p297) target = $region16
        $region15: #{tpu_custom_call.1} parent=11 // pred_region
          _
        $region16: #{tpu_custom_call.1} parent=11 // pred_fallthru
          _
        // Predicated region
        $region17: #{tpu_custom_call.1} parent=11 // pred_check
          %p300 = pneg %p88
        $region18: #{tpu_custom_call.1} parent=11 // pred_check_branch
          %302 = sbr.rel (%p300) target = $region20
        $region19: #{tpu_custom_call.1} parent=11 // pred_region
          _
        $region20: #{tpu_custom_call.1} parent=11 // pred_fallthru
          _
        // Predicated region
        $region21: #{tpu_custom_call.1} parent=11 // pred_check
          %p303 = pneg %p109
        $region22: #{tpu_custom_call.1} parent=11 // pred_check_branch
          %305 = sbr.rel (%p303) target = $region24
        $region23: #{tpu_custom_call.1} parent=11 // pred_region
          _
        $region24: #{tpu_custom_call.1} parent=11 // pred_fallthru
          _
        // Predicated region
        $region25: #{tpu_custom_call.1} parent=11 // pred_check
          %p306 = pneg %p130
        $region26: #{tpu_custom_call.1} parent=11 // pred_check_branch
          %308 = sbr.rel (%p306) target = $region28
        $region27: #{tpu_custom_call.1} parent=11 // pred_region
          _
        $region28: #{tpu_custom_call.1} parent=11 // pred_fallthru
          _
        // Predicated region
        $region29: #{tpu_custom_call.1} parent=11 // pred_check
          %p309 = pneg %p151
        $region30: #{tpu_custom_call.1} parent=11 // pred_check_branch
          %311 = sbr.rel (%p309) target = $region32
        $region31: #{tpu_custom_call.1} parent=11 // pred_region
          _
        $region32: #{tpu_custom_call.1} parent=11 // pred_fallthru
          _
        // Predicated region
        $region33: #{tpu_custom_call.1} parent=11 // pred_check
          %p312 = pneg %p172
        $region34: #{tpu_custom_call.1} parent=11 // pred_check_branch
          %314 = sbr.rel (%p312) target = $region36
        $region35: #{tpu_custom_call.1} parent=11 // pred_region
          _
        $region36: #{tpu_custom_call.1} parent=11 // pred_fallthru
          _
        // Predicated region
        $region37: #{tpu_custom_call.1} parent=11 // pred_check
          %p315 = pneg %p193
        $region38: #{tpu_custom_call.1} parent=11 // pred_check_branch
          %317 = sbr.rel (%p315) target = $region40
        $region39: #{tpu_custom_call.1} parent=11 // pred_region
          _
        $region40: #{tpu_custom_call.1} parent=11 // pred_fallthru
          _
        // Predicated region
        $region41: #{tpu_custom_call.1} parent=11 // pred_check
          %p318 = pneg %p214
        $region42: #{tpu_custom_call.1} parent=11 // pred_check_branch
          %320 = sbr.rel (%p318) target = $region44
        $region43: #{tpu_custom_call.1} parent=11 // pred_region
          _
        $region44: #{tpu_custom_call.1} parent=11 // pred_fallthru
          _
        // Predicated region
        $region45: #{tpu_custom_call.1} parent=11 // pred_check
          %p321 = pneg %p235
        $region46: #{tpu_custom_call.1} parent=11 // pred_check_branch
          %323 = sbr.rel (%p321) target = $region48
        $region47: #{tpu_custom_call.1} parent=11 // pred_region
          _
        $region48: #{tpu_custom_call.1} parent=11 // pred_fallthru
          _
        // Predicated region
        $region49: #{tpu_custom_call.1} parent=11 // pred_check
          %p324 = pneg %p256
        $region50: #{tpu_custom_call.1} parent=11 // pred_check_branch
          %326 = sbr.rel (%p324) target = $region52
        $region51: #{tpu_custom_call.1} parent=11 // pred_region
          _
        $region52: #{tpu_custom_call.1} parent=11 // pred_fallthru
          _
      $region12: #{tpu_custom_call.1} parent=5 // pred_fallthru
        _
      %p327 = scmp.lt.s32.totalorder %s20, 2
      // Predicated region
      $region53: #{tpu_custom_call.1} parent=5 // pred_check
        %p328 = pneg %p327
      $region54: #{tpu_custom_call.1} parent=5 // pred_check_branch
        %330 = sbr.rel (%p328) target = $region56
      $region55: #{tpu_custom_call.1} parent=5 // pred_region
        // Predicated region
        $region57: #{tpu_custom_call.1} parent=55 // pred_check
          %p331 = pneg %p40
        $region58: #{tpu_custom_call.1} parent=55 // pred_check_branch
          %333 = sbr.rel (%p331) target = $region60
        $region59: #{tpu_custom_call.1} parent=55 // pred_region
          %p334 = scmp.lt.s32.totalorder %s20, 1
          %s335 = scalar_select %p334, %s20, 1
          %s336 = smul.addr %s335, 8
          %s337 = scalar_lea.vmem %s0, %s336
        $region60: #{tpu_custom_call.1} parent=55 // pred_fallthru
          _
      $region56: #{tpu_custom_call.1} parent=5 // pred_fallthru
        _
      %p338 = scmp.le.s32.totalorder 1, %s20
      %p339 = scmp.lt.s32.totalorder %s20, 3
      %p340 = pnand %p338, %p339
      %p341 = pneg %p340
      // Predicated region
      $region61: #{tpu_custom_call.1} parent=5 // pred_check
        _
      $region62: #{tpu_custom_call.1} parent=5 // pred_check_branch
        %343 = sbr.rel (%p340) target = $region64
      $region63: #{tpu_custom_call.1} parent=5 // pred_region
        %s344 = ssub.s32 %s20, 1
        %p345 = scmp.lt.s32.totalorder %s25, 1
        %s346 = scalar_select %p345, %s25, 1
        %s347 = smul.addr %s346, 8
        %s348 = scalar_lea.vmem %s0, %s347
        %p349 = pneg %p46
        %p350 = pneg %p43
        %p351 = pneg %p67
        %p352 = pneg %p64
        %p353 = pneg %p88
        %p354 = pneg %p85
        %p355 = pneg %p109
        %p356 = pneg %p106
        %p357 = pneg %p130
        %p358 = pneg %p127
        %p359 = pneg %p151
        %p360 = pneg %p148
        %p361 = pneg %p172
        %p362 = pneg %p169
        %p363 = pneg %p193
        %p364 = pneg %p190
        %p365 = pneg %p214
        %p366 = pneg %p211
        %p367 = pneg %p235
        %p368 = pneg %p232
        %p369 = pneg %p256
        %p370 = pneg %p253
        %p371 = pneg %p282
        %p372 = pneg %p279
        %s373 = sand.u32 %s269, 1
        %s374 = scalar_lea.sflag [#allocation3], %s373
        %s375 = sand.u32 %s269, 1
        %s376 = smul.addr %s375, 8
        %s377 = scalar_lea.vmem [#allocation2], %s376
        %p378 = scmp.lt.s32.totalorder %s25, 1
        %s379 = scalar_select %p378, %s25, 1
        %s380 = smul.addr %s379, 8
        %s381 = scalar_lea.vmem %s0, %s380
        %v383 = vld [vmem:[%s381] sm:$0xff]
        %v384 = vpack.c.bf16 %v383, %v383
        %v385 = vld [vmem:[%s1] sm:$0xff]
        %v386 = vld [vmem:[%s1 + $0x8] sm:$0xff]
        %v387 = vld [vmem:[%s1 + $0x10] sm:$0xff]
        %v388 = vld [vmem:[%s1 + $0x18] sm:$0xff]
        %v389 = vld [vmem:[%s1 + $0x20] sm:$0xff]
        %v390 = vld [vmem:[%s1 + $0x28] sm:$0xff]
        %v391 = vld [vmem:[%s1 + $0x30] sm:$0xff]
        %v392 = vld [vmem:[%s1 + $0x38] sm:$0xff]
        %v393 = vld [vmem:[%s2] sm:$0x3]
        %v395 = vlaneseq
        %v396 = vshrl.u32 %v395, 7
        %v397 = vsub.s32 0, %v396
        %v398 = vrot.slane %v393, %v397
        %v399 = vlaneseq
        %v400 = vshrl.u32 %v399, 7
        %v401 = vsub.s32 1, %v400
        %v402 = vrot.slane %v393, %v401
        %v413 = vunpack.c.l.b16 %v385
        %v414 = vunpack.c.h.b16 %v385
        %v415 = vunpack.c.l.b16 %v386
        %v416 = vunpack.c.h.b16 %v386
        %v417 = vunpack.c.l.b16 %v387
        %v418 = vunpack.c.h.b16 %v387
        %v419 = vunpack.c.l.b16 %v388
        %v420 = vunpack.c.h.b16 %v388
        %v421 = vunpack.c.l.b16 %v389
        %v422 = vunpack.c.h.b16 %v389
        %v423 = vunpack.c.l.b16 %v390
        %v424 = vunpack.c.h.b16 %v390
        %v425 = vunpack.c.l.b16 %v391
        %v426 = vunpack.c.h.b16 %v391
        %v427 = vunpack.c.l.b16 %v392
        %v428 = vunpack.c.h.b16 %v392
        %v429 = vpack.c.b16 %v415, %v413
        %v430 = vpack.c.b16 %v416, %v414
        %v431 = vpack.c.b16 %v419, %v417
        %v432 = vpack.c.b16 %v420, %v418
        %v433 = vpack.c.b16 %v423, %v421
        %v434 = vpack.c.b16 %v424, %v422
        %v435 = vpack.c.b16 %v427, %v425
        %v436 = vpack.c.b16 %v428, %v426
        %vm445 = vcmask 523264
        %v447 = vsel %vm445, %v384, 0
        %449 = vmatprep.subr.bf16.mxu0 %v430
        %450 = vmatpush1.bf16.msra.mxu0 %v429
        %451 = vmatprep.subr.bf16.mxu0 %v432
        %452 = vmatpush1.bf16.msra.mxu0 %v431
        %453 = vmatprep.subr.bf16.mxu0 %v434
        %454 = vmatpush1.bf16.msra.mxu0 %v433
        %455 = vmatprep.subr.bf16.mxu0 %v436
        %456 = vmatpush1.bf16.msra.mxu0 %v435
        %457 = vmatprep.subr.bf16.mxu0 0
        %458 = vmatpush1.bf16.msra.mxu0 0
        %459 = vmatprep.subr.bf16.mxu0 0
        %460 = vmatpush1.bf16.msra.mxu0 0
        %461 = vmatprep.subr.bf16.mxu0 0
        %462 = vmatpush1.bf16.msra.mxu0 0
        %463 = vmatprep.subr.bf16.mxu0 0
        %464 = vmatpush1.bf16.msra.mxu0 0
        %465 = vmatprep.subr.bf16.mxu0 0
        %466 = vmatpush1.bf16.msra.mxu0 0
        %467 = vmatprep.subr.bf16.mxu0 0
        %468 = vmatpush1.bf16.msra.mxu0 0
        %469 = vmatprep.subr.bf16.mxu0 0
        %470 = vmatpush1.bf16.msra.mxu0 0
        %471 = vmatprep.subr.bf16.mxu0 0
        %472 = vmatpush1.bf16.msra.mxu0 0
        %473 = vmatprep.subr.bf16.mxu0 0
        %474 = vmatpush1.bf16.msra.mxu0 0
        %475 = vmatprep.subr.bf16.mxu0 0
        %476 = vmatpush1.bf16.msra.mxu0 0
        %477 = vmatprep.subr.bf16.mxu0 0
        %478 = vmatpush1.bf16.msra.mxu0 0
        %479 = vmatprep.subr.bf16.mxu0 0
        %480 = vmatpush1.bf16.msra.mxu0 0
        %481 = vmatprep.mubr.bf16.mxu0 0
        %482 = vmatmul.mubr.bf16.gmra.mrb[0].mxu0 %v447
        %v483 = vpop.f32.mrb[0].mxu0
        %v484 = vadd.f32 %v398, %v483
        %v485 = vpop.f32.mrb[0].mxu0
        %v486 = vadd.f32 %v402, %v485
        %v487 = vpop.f32.mrb[0].mxu0
        %v488 = vpop.f32.mrb[0].mxu0
        %489 = vdwg.mxu0
        %v490 = vsub.f32 0.0, %v486
        %v491 = vmul.f32 %v490, 1.442695
        %v492 = vpow.pop %v491
        %v493 = vadd.f32 %v492, 1.0
        %v494 = vrcp.pop %v493
        %v495 = vmul.f32 1.0, %v494
        %v496 = vmul.f32 %v486, %v495
        %v497 = vpack.c.bf16 %v496, %v496
        %v498 = vcombine.high %v484, 0.0
        %v500 = vunpack.c.l.s4 1983009808
        %v501 = vunpack.c.0.s8 %v500
        %v502 = vlaneseq
        %v503 = vshrl.u32 %v502, 7
        %v504 = vsub.s32 %v501, %v503
        %v505 = vrot.slane %v484, %v504
        %v507 = vunpack.c.l.s4 1983009808
        %v508 = vunpack.c.0.s8 %v507
        %v509 = vlaneseq
        %v510 = vshrl.u32 %v509, 7
        %v511 = vsub.s32 %v508, %v510
        %v512 = vrot.slane %v498, %v511
        %v513 = vcombine.high %v505, 0.0
        %v515 = vunpack.c.l.s4 1934713408
        %v516 = vunpack.c.0.s8 %v515
        %v517 = vlaneseq
        %v518 = vshrl.u32 %v517, 7
        %v519 = vsub.s32 %v516, %v518
        %v520 = vrot.slane %v505, %v519
        %v522 = vunpack.c.l.s4 1934713408
        %v523 = vunpack.c.0.s8 %v522
        %v524 = vlaneseq
        %v525 = vshrl.u32 %v524, 7
        %v526 = vsub.s32 %v523, %v525
        %v527 = vrot.slane %v513, %v526
        %v528 = vcombine.high %v512, 0.0
        %v530 = vunpack.c.l.s4 1934713408
        %v531 = vunpack.c.0.s8 %v530
        %v532 = vlaneseq
        %v533 = vshrl.u32 %v532, 7
        %v534 = vsub.s32 %v531, %v533
        %v535 = vrot.slane %v512, %v534
        %v537 = vunpack.c.l.s4 1934713408
        %v538 = vunpack.c.0.s8 %v537
        %v539 = vlaneseq
        %v540 = vshrl.u32 %v539, 7
        %v541 = vsub.s32 %v538, %v540
        %v542 = vrot.slane %v528, %v541
        %v543 = vcombine.high %v520, 0.0
        %v544 = vcombine.high %v527, 0.0
        %v545 = vcombine.high %v535, 0.0
        %v546 = vcombine.high %v542, 0.0
        %v547 = vld [vmem:[%s3] sm:$0xf]
        %v548 = vld [vmem:[%s3 + $0x4] sm:$0xf]
        %v549 = vld [vmem:[%s3 + $0x8] sm:$0xf]
        %v550 = vpack.c.bf16 %v520, %v520
        %v551 = vpack.c.bf16 %v543, %v543
        %v552 = vpack.c.bf16 %v527, %v527
        %v553 = vpack.c.bf16 %v544, %v544
        %v554 = vpack.c.bf16 %v535, %v535
        %v555 = vpack.c.bf16 %v545, %v545
        %v556 = vpack.c.bf16 %v542, %v542
        %v557 = vpack.c.bf16 %v546, %v546
        %v561 = vunpack.c.l.b16 %v547
        %v562 = vunpack.c.l.b16 %v548
        %v563 = vunpack.c.l.b16 %v549
        %v564 = vpack.c.b16 %v562, %v561
        %v565 = vpack.c.b16 %v563, %v563
        %v574 = vunpack.c.l.b16 %v550
        %v575 = vunpack.c.l.b16 %v551
        %v576 = vunpack.c.l.b16 %v552
        %v577 = vunpack.c.l.b16 %v553
        %v578 = vunpack.c.l.b16 %v554
        %v579 = vunpack.c.l.b16 %v555
        %v580 = vunpack.c.l.b16 %v556
        %v581 = vunpack.c.l.b16 %v557
        %v582 = vrot.slane %v575, 7
        %vm583 = vcmask 1041409
        %v584 = vsel %vm583, %v582, %v574
        %v585 = vrot.slane %v576, 6
        %vm586 = vcmask 1042434
        %v587 = vsel %vm586, %v585, %v584
        %v588 = vrot.slane %v577, 5
        %vm589 = vcmask 1043459
        %v590 = vsel %vm589, %v588, %v587
        %v591 = vrot.slane %v578, 4
        %vm592 = vcmask 1044484
        %v593 = vsel %vm592, %v591, %v590
        %v594 = vrot.slane %v579, 3
        %vm595 = vcmask 1045509
        %v596 = vsel %vm595, %v594, %v593
        %v597 = vrot.slane %v580, 2
        %vm598 = vcmask 1046534
        %v599 = vsel %vm598, %v597, %v596
        %v600 = vrot.slane %v581, 1
        %vm601 = vcmask 1047559
        %v602 = vsel %vm601, %v600, %v599
        %v603 = vpack.c.b16 %v602, %v602
        %vm604 = vcmask 64512
        %v606 = vsel %vm604, %v564, 0
        %v609 = vsel %vm604, %v565, 0
        %vm611 = vcmask 1043456
        %v613 = vsel %vm611, %v603, 0
        %615 = vmatprep.subr.bf16.mxu0 0
        %616 = vmatpush1.bf16.msra.mxu0 %v613
        %617 = vmatprep.subr.bf16.mxu0 0
        %618 = vmatpush1.bf16.msra.mxu0 0
        %619 = vmatprep.subr.bf16.mxu0 0
        %620 = vmatpush1.bf16.msra.mxu0 0
        %621 = vmatprep.subr.bf16.mxu0 0
        %622 = vmatpush1.bf16.msra.mxu0 0
        %623 = vmatprep.subr.bf16.mxu0 0
        %624 = vmatpush1.bf16.msra.mxu0 0
        %625 = vmatprep.subr.bf16.mxu0 0
        %626 = vmatpush1.bf16.msra.mxu0 0
        %627 = vmatprep.subr.bf16.mxu0 0
        %628 = vmatpush1.bf16.msra.mxu0 0
        %629 = vmatprep.subr.bf16.mxu0 0
        %630 = vmatpush1.bf16.msra.mxu0 0
        %631 = vmatprep.subr.bf16.mxu0 0
        %632 = vmatpush1.bf16.msra.mxu0 0
        %633 = vmatprep.subr.bf16.mxu0 0
        %634 = vmatpush1.bf16.msra.mxu0 0
        %635 = vmatprep.subr.bf16.mxu0 0
        %636 = vmatpush1.bf16.msra.mxu0 0
        %637 = vmatprep.subr.bf16.mxu0 0
        %638 = vmatpush1.bf16.msra.mxu0 0
        %639 = vmatprep.subr.bf16.mxu0 0
        %640 = vmatpush1.bf16.msra.mxu0 0
        %641 = vmatprep.subr.bf16.mxu0 0
        %642 = vmatpush1.bf16.msra.mxu0 0
        %643 = vmatprep.subr.bf16.mxu0 0
        %644 = vmatpush1.bf16.msra.mxu0 0
        %645 = vmatprep.subr.bf16.mxu0 0
        %646 = vmatpush1.bf16.msra.mxu0 0
        %647 = vmatprep.mubr.bf16.mxu0 0
        %648 = vmatmul.mubr.bf16.gmra.mrb[0].mxu0 %v606
        %v649 = vpop.f32.mrb[0].mxu0
        %v650 = vadd.f32 0.0, %v649
        %v651 = vpop.f32.mrb[0].mxu0
        %v652 = vpop.f32.mrb[0].mxu0
        %v653 = vadd.f32 0.0, %v652
        %v654 = vpop.f32.mrb[0].mxu0
        %655 = vmatprep.mubr.bf16.mxu0 0
        %656 = vmatmul.mubr.bf16.gmra.mrb[0].mxu0 %v609
        %v657 = vpop.f32.mrb[0].mxu0
        %v658 = vadd.f32 0.0, %v657
        %v659 = vpop.f32.mrb[0].mxu0
        %v660 = vpop.f32.mrb[0].mxu0
        %v661 = vpop.f32.mrb[0].mxu0
        %662 = vdwg.mxu0
        %664 = vrot.lane.b32.xlu0 %v650, 1
        %v665 = vpop.permute.xlu0 %664
        %vm667 = vcmask 7168
        %v668 = vsel %vm667, 0.0, %v665
        %670 = vrot.lane.b32.xlu0 %v658, 127
        %v671 = vpop.permute.xlu0 %670
        %vm673 = vcmask 1039360
        %v674 = vsel %vm673, %v671, 0.0
        %v675 = vlaneseq
        %v676 = vand.u32 %v675, 127
        %vm677 = vcmp.lt.s32.totalorder %v676, 0
        %v678 = vsub.s32 0, %v676
        %v679 = vsel %vm677, %v678, %v676
        %v680 = vshrl.u32 %v679, 7
        %v681 = vand.u32 %v679, 127
        %v682 = vsub.s32 0, %v681
        %v683 = vsel %vm677, %v682, %v681
        %vm684 = vcmp.ne.s32.totalorder %v683, 0
        %vm685 = vcmp.lt.s32.totalorder %v683, 0
        %vm686 = vmand %vm685, %vm684
        %v687 = vadd.s32 %v683, 128
        %v688 = vsel %vm686, %v687, %v683
        %vm689 = vcmp.eq.s32.totalorder %v688, 0
        %v690 = vsel %vm689, 0.0, %v668
        %v691 = vadd.f32 %v690, %v653
        %vm692 = vcmp.eq.s32.totalorder %v688, 127
        %v693 = vsel %vm692, 0.0, %v674
        %v694 = vadd.f32 %v691, %v693
        %v695 = vld [vmem:[%s4] sm:$0xff]
        %697 = vset.pattern.permute.xlu0 0
        %698 = vperm.xlu0 %697, %v695
        %v699 = vpop.permute.xlu0 %698
        %v701 = vadd.f32 %v694, %v699
        %v702 = vsub.f32 0.0, %v701
        %v703 = vmul.f32 %v702, 1.442695
        %v704 = vpow.pop %v703
        %v705 = vadd.f32 %v704, 1.0
        %v706 = vrcp.pop %v705
        %v707 = vmul.f32 1.0, %v706
        %v708 = vmul.f32 %v701, %v707
        %v710 = vcombine.high %v708, %v708
        %v712 = vunpack.c.l.s4 1966171168
        %v713 = vunpack.c.0.s8 %v712
        %v714 = vlaneseq
        %v715 = vshrl.u32 %v714, 7
        %v716 = vsub.s32 %v713, %v715
        %v717 = vrot.slane %v708, %v716
        %v719 = vunpack.c.l.s4 1966171168
        %v720 = vunpack.c.0.s8 %v719
        %v721 = vlaneseq
        %v722 = vshrl.u32 %v721, 7
        %v723 = vsub.s32 %v720, %v722
        %v724 = vrot.slane %v710, %v723
        %v725 = vcombine.high %v717, %v717
        %v726 = vcombine.high %v724, %v724
        %v728 = vunpack.c.l.s4 1966171168
        %v729 = vunpack.c.0.s8 %v728
        %v730 = vlaneseq
        %v731 = vshrl.u32 %v730, 7
        %v732 = vsub.s32 %v729, %v731
        %v733 = vrot.slane %v717, %v732
        %v735 = vunpack.c.l.s4 1966171168
        %v736 = vunpack.c.0.s8 %v735
        %v737 = vlaneseq
        %v738 = vshrl.u32 %v737, 7
        %v739 = vsub.s32 %v736, %v738
        %v740 = vrot.slane %v724, %v739
        %v742 = vunpack.c.l.s4 1966171168
        %v743 = vunpack.c.0.s8 %v742
        %v744 = vlaneseq
        %v745 = vshrl.u32 %v744, 7
        %v746 = vsub.s32 %v743, %v745
        %v747 = vrot.slane %v725, %v746
        %v749 = vunpack.c.l.s4 1966171168
        %v750 = vunpack.c.0.s8 %v749
        %v751 = vlaneseq
        %v752 = vshrl.u32 %v751, 7
        %v753 = vsub.s32 %v750, %v752
        %v754 = vrot.slane %v726, %v753
        %v755 = vcombine.high %v733, %v733
        %v756 = vcombine.high %v740, %v740
        %v757 = vcombine.high %v747, %v747
        %v758 = vcombine.high %v754, %v754
        %v759 = vcombine.low %v733, %v747
        %v760 = vcombine.low %v755, %v757
        %v761 = vcombine.low %v740, %v754
        %v762 = vcombine.low %v756, %v758
        %v764 = vunpack.c.l.s4 1966171168
        %v765 = vunpack.c.0.s8 %v764
        %v766 = vlaneseq
        %v767 = vshrl.u32 %v766, 7
        %v768 = vsub.s32 %v765, %v767
        %v769 = vrot.slane %v759, %v768
        %v771 = vunpack.c.l.s4 1966171168
        %v772 = vunpack.c.0.s8 %v771
        %v773 = vlaneseq
        %v774 = vshrl.u32 %v773, 7
        %v775 = vsub.s32 %v772, %v774
        %v776 = vrot.slane %v760, %v775
        %v778 = vunpack.c.l.s4 1966171168
        %v779 = vunpack.c.0.s8 %v778
        %v780 = vlaneseq
        %v781 = vshrl.u32 %v780, 7
        %v782 = vsub.s32 %v779, %v781
        %v783 = vrot.slane %v761, %v782
        %v785 = vunpack.c.l.s4 1966171168
        %v786 = vunpack.c.0.s8 %v785
        %v787 = vlaneseq
        %v788 = vshrl.u32 %v787, 7
        %v789 = vsub.s32 %v786, %v788
        %v790 = vrot.slane %v762, %v789
        %v791 = vcombine.low %v769, %v776
        %v792 = vcombine.low %v783, %v790
        %v794 = vunpack.c.l.s4 1966171168
        %v795 = vunpack.c.0.s8 %v794
        %v796 = vlaneseq
        %v797 = vshrl.u32 %v796, 7
        %v798 = vsub.s32 %v795, %v797
        %v799 = vrot.slane %v791, %v798
        %v801 = vunpack.c.l.s4 1966171168
        %v802 = vunpack.c.0.s8 %v801
        %v803 = vlaneseq
        %v804 = vshrl.u32 %v803, 7
        %v805 = vsub.s32 %v802, %v804
        %v806 = vrot.slane %v792, %v805
        %v807 = vcombine.low %v799, %v806
        %v809 = vpack.c.bf16 %v807, %v807
        %v810 = vld [vmem:[%s5] sm:$0xf]
        %v811 = vld [vmem:[%s5 + $0x4] sm:$0xf]
        %v812 = vld [vmem:[%s5 + $0x8] sm:$0xf]
        %v813 = vld [vmem:[%s5 + $0xc] sm:$0xf]
        %v814 = vld [vmem:[%s5 + $0x10] sm:$0xf]
        %v815 = vld [vmem:[%s5 + $0x14] sm:$0xf]
        %v816 = vld [vmem:[%s5 + $0x18] sm:$0xf]
        %v817 = vld [vmem:[%s5 + $0x1c] sm:$0xf]
        %v818 = vld [vmem:[%s5 + $0x20] sm:$0xf]
        %v819 = vld [vmem:[%s5 + $0x24] sm:$0xf]
        %v820 = vld [vmem:[%s5 + $0x28] sm:$0xf]
        %v821 = vld [vmem:[%s5 + $0x2c] sm:$0xf]
        %v822 = vld [vmem:[%s5 + $0x30] sm:$0xf]
        %v823 = vld [vmem:[%s5 + $0x34] sm:$0xf]
        %v824 = vld [vmem:[%s5 + $0x38] sm:$0xf]
        %v825 = vld [vmem:[%s5 + $0x3c] sm:$0xf]
        %v826 = vld [vmem:[%s6] sm:$0x1]
        %v828 = vlaneseq
        %v829 = vshrl.u32 %v828, 7
        %v830 = vsub.s32 0, %v829
        %v831 = vrot.slane %v826, %v830
        %v849 = vunpack.c.l.b16 %v810
        %v850 = vunpack.c.l.b16 %v811
        %v851 = vunpack.c.l.b16 %v812
        %v852 = vunpack.c.l.b16 %v813
        %v853 = vunpack.c.l.b16 %v814
        %v854 = vunpack.c.l.b16 %v815
        %v855 = vunpack.c.l.b16 %v816
        %v856 = vunpack.c.l.b16 %v817
        %v857 = vunpack.c.l.b16 %v818
        %v858 = vunpack.c.l.b16 %v819
        %v859 = vunpack.c.l.b16 %v820
        %v860 = vunpack.c.l.b16 %v821
        %v861 = vunpack.c.l.b16 %v822
        %v862 = vunpack.c.l.b16 %v823
        %v863 = vunpack.c.l.b16 %v824
        %v864 = vunpack.c.l.b16 %v825
        %v865 = vpack.c.b16 %v850, %v849
        %v866 = vpack.c.b16 %v852, %v851
        %v867 = vpack.c.b16 %v854, %v853
        %v868 = vpack.c.b16 %v856, %v855
        %v869 = vpack.c.b16 %v858, %v857
        %v870 = vpack.c.b16 %v860, %v859
        %v871 = vpack.c.b16 %v862, %v861
        %v872 = vpack.c.b16 %v864, %v863
        %881 = vmatprep.subr.bf16.mxu0 0
        %882 = vmatpush1.bf16.msra.mxu0 %v865
        %883 = vmatprep.subr.bf16.mxu0 0
        %884 = vmatpush1.bf16.msra.mxu0 %v866
        %885 = vmatprep.subr.bf16.mxu0 0
        %886 = vmatpush1.bf16.msra.mxu0 %v867
        %887 = vmatprep.subr.bf16.mxu0 0
        %888 = vmatpush1.bf16.msra.mxu0 %v868
        %889 = vmatprep.subr.bf16.mxu0 0
        %890 = vmatpush1.bf16.msra.mxu0 %v869
        %891 = vmatprep.subr.bf16.mxu0 0
        %892 = vmatpush1.bf16.msra.mxu0 %v870
        %893 = vmatprep.subr.bf16.mxu0 0
        %894 = vmatpush1.bf16.msra.mxu0 %v871
        %895 = vmatprep.subr.bf16.mxu0 0
        %896 = vmatpush1.bf16.msra.mxu0 %v872
        %897 = vmatprep.subr.bf16.mxu0 0
        %898 = vmatpush1.bf16.msra.mxu0 0
        %899 = vmatprep.subr.bf16.mxu0 0
        %900 = vmatpush1.bf16.msra.mxu0 0
        %901 = vmatprep.subr.bf16.mxu0 0
        %902 = vmatpush1.bf16.msra.mxu0 0
        %903 = vmatprep.subr.bf16.mxu0 0
        %904 = vmatpush1.bf16.msra.mxu0 0
        %905 = vmatprep.subr.bf16.mxu0 0
        %906 = vmatpush1.bf16.msra.mxu0 0
        %907 = vmatprep.subr.bf16.mxu0 0
        %908 = vmatpush1.bf16.msra.mxu0 0
        %909 = vmatprep.subr.bf16.mxu0 0
        %910 = vmatpush1.bf16.msra.mxu0 0
        %911 = vmatprep.subr.bf16.mxu0 0
        %912 = vmatpush1.bf16.msra.mxu0 0
        %913 = vmatprep.mubr.bf16.mxu0 0
        %914 = vmatmul.mubr.bf16.gmra.mrb[0].mxu0 %v809
        %v915 = vpop.f32.mrb[0].mxu0
        %v916 = vadd.f32 %v831, %v915
        %v917 = vpop.f32.mrb[0].mxu0
        %v918 = vpop.f32.mrb[0].mxu0
        %v919 = vpop.f32.mrb[0].mxu0
        %920 = vdwg.mxu0
        %v921 = vpack.c.bf16 %v916, %v916
        %v922 = vld [vmem:[%s7] sm:$0xff]
        %v923 = vld [vmem:[%s7 + $0x8] sm:$0xff]
        %v924 = vld [vmem:[%s7 + $0x10] sm:$0xff]
        %v925 = vld [vmem:[%s7 + $0x18] sm:$0xff]
        %v926 = vld [vmem:[%s7 + $0x20] sm:$0xff]
        %v927 = vld [vmem:[%s7 + $0x28] sm:$0xff]
        %v928 = vld [vmem:[%s7 + $0x30] sm:$0xff]
        %v929 = vld [vmem:[%s7 + $0x38] sm:$0xff]
        %v930 = vld [vmem:[%s7 + $0x40] sm:$0xff]
        %v931 = vld [vmem:[%s7 + $0x48] sm:$0xff]
        %v932 = vld [vmem:[%s7 + $0x50] sm:$0xff]
        %v933 = vld [vmem:[%s7 + $0x58] sm:$0xff]
        %v934 = vld [vmem:[%s7 + $0x60] sm:$0xff]
        %v935 = vld [vmem:[%s7 + $0x68] sm:$0xff]
        %v936 = vld [vmem:[%s7 + $0x70] sm:$0xff]
        %v937 = vld [vmem:[%s7 + $0x78] sm:$0xff]
        %v938 = vld [vmem:[%s8] sm:$0x3]
        %v940 = vlaneseq
        %v941 = vshrl.u32 %v940, 7
        %v942 = vsub.s32 0, %v941
        %v943 = vrot.slane %v938, %v942
        %v944 = vlaneseq
        %v945 = vshrl.u32 %v944, 7
        %v946 = vsub.s32 1, %v945
        %v947 = vrot.slane %v938, %v946
        %v966 = vunpack.c.l.b16 %v922
        %v967 = vunpack.c.h.b16 %v922
        %v968 = vunpack.c.l.b16 %v923
        %v969 = vunpack.c.h.b16 %v923
        %v970 = vunpack.c.l.b16 %v924
        %v971 = vunpack.c.h.b16 %v924
        %v972 = vunpack.c.l.b16 %v925
        %v973 = vunpack.c.h.b16 %v925
        %v974 = vunpack.c.l.b16 %v926
        %v975 = vunpack.c.h.b16 %v926
        %v976 = vunpack.c.l.b16 %v927
        %v977 = vunpack.c.h.b16 %v927
        %v978 = vunpack.c.l.b16 %v928
        %v979 = vunpack.c.h.b16 %v928
        %v980 = vunpack.c.l.b16 %v929
        %v981 = vunpack.c.h.b16 %v929
        %v982 = vunpack.c.l.b16 %v930
        %v983 = vunpack.c.h.b16 %v930
        %v984 = vunpack.c.l.b16 %v931
        %v985 = vunpack.c.h.b16 %v931
        %v986 = vunpack.c.l.b16 %v932
        %v987 = vunpack.c.h.b16 %v932
        %v988 = vunpack.c.l.b16 %v933
        %v989 = vunpack.c.h.b16 %v933
        %v990 = vunpack.c.l.b16 %v934
        %v991 = vunpack.c.h.b16 %v934
        %v992 = vunpack.c.l.b16 %v935
        %v993 = vunpack.c.h.b16 %v935
        %v994 = vunpack.c.l.b16 %v936
        %v995 = vunpack.c.h.b16 %v936
        %v996 = vunpack.c.l.b16 %v937
        %v997 = vunpack.c.h.b16 %v937
        %v998 = vpack.c.b16 %v968, %v966
        %v999 = vpack.c.b16 %v969, %v967
        %v1000 = vpack.c.b16 %v972, %v970
        %v1001 = vpack.c.b16 %v973, %v971
        %v1002 = vpack.c.b16 %v976, %v974
        %v1003 = vpack.c.b16 %v977, %v975
        %v1004 = vpack.c.b16 %v980, %v978
        %v1005 = vpack.c.b16 %v981, %v979
        %v1006 = vpack.c.b16 %v984, %v982
        %v1007 = vpack.c.b16 %v985, %v983
        %v1008 = vpack.c.b16 %v988, %v986
        %v1009 = vpack.c.b16 %v989, %v987
        %v1010 = vpack.c.b16 %v992, %v990
        %v1011 = vpack.c.b16 %v993, %v991
        %v1012 = vpack.c.b16 %v996, %v994
        %v1013 = vpack.c.b16 %v997, %v995
        %1030 = vmatprep.subr.bf16.mxu0 %v999
        %1031 = vmatpush1.bf16.msra.mxu0 %v998
        %1032 = vmatprep.subr.bf16.mxu0 %v1001
        %1033 = vmatpush1.bf16.msra.mxu0 %v1000
        %1034 = vmatprep.subr.bf16.mxu0 %v1003
        %1035 = vmatpush1.bf16.msra.mxu0 %v1002
        %1036 = vmatprep.subr.bf16.mxu0 %v1005
        %1037 = vmatpush1.bf16.msra.mxu0 %v1004
        %1038 = vmatprep.subr.bf16.mxu0 %v1007
        %1039 = vmatpush1.bf16.msra.mxu0 %v1006
        %1040 = vmatprep.subr.bf16.mxu0 %v1009
        %1041 = vmatpush1.bf16.msra.mxu0 %v1008
        %1042 = vmatprep.subr.bf16.mxu0 %v1011
        %1043 = vmatpush1.bf16.msra.mxu0 %v1010
        %1044 = vmatprep.subr.bf16.mxu0 %v1013
        %1045 = vmatpush1.bf16.msra.mxu0 %v1012
        %1046 = vmatprep.subr.bf16.mxu0 0
        %1047 = vmatpush1.bf16.msra.mxu0 0
        %1048 = vmatprep.subr.bf16.mxu0 0
        %1049 = vmatpush1.bf16.msra.mxu0 0
        %1050 = vmatprep.subr.bf16.mxu0 0
        %1051 = vmatpush1.bf16.msra.mxu0 0
        %1052 = vmatprep.subr.bf16.mxu0 0
        %1053 = vmatpush1.bf16.msra.mxu0 0
        %1054 = vmatprep.subr.bf16.mxu0 0
        %1055 = vmatpush1.bf16.msra.mxu0 0
        %1056 = vmatprep.subr.bf16.mxu0 0
        %1057 = vmatpush1.bf16.msra.mxu0 0
        %1058 = vmatprep.subr.bf16.mxu0 0
        %1059 = vmatpush1.bf16.msra.mxu0 0
        %1060 = vmatprep.subr.bf16.mxu0 0
        %1061 = vmatpush1.bf16.msra.mxu0 0
        %1062 = vmatprep.mubr.bf16.mxu0 0
        %1063 = vmatmul.mubr.bf16.gmra.mrb[0].mxu0 %v921
        %v1064 = vpop.f32.mrb[0].mxu0
        %v1065 = vadd.f32 %v943, %v1064
        %v1066 = vpop.f32.mrb[0].mxu0
        %v1067 = vadd.f32 %v947, %v1066
        %v1068 = vpop.f32.mrb[0].mxu0
        %v1069 = vpop.f32.mrb[0].mxu0
        %1070 = vdwg.mxu0
        %v1071 = vmax.f32 %v1065, 0.0
        %v1072 = vand.u32 2147483647, %v1065
        %v1073 = vsub.f32 0.0, %v1072
        %v1074 = vmul.f32 %v1073, 1.442695
        %v1075 = vpow.pop %v1074
        %v1076 = vadd.f32 %v1075, 1.0
        %v1077 = vlog2.pop %v1076
        %v1078 = vmul.f32 %v1077, 0.6931472
        %v1079 = vadd.f32 %v1071, %v1078
        %1081 = vrot.lane.b32.xlu0 %v1067, 112
        %v1082 = vpop.permute.xlu0 %1081
        %v1084 = vmul.f32 %v1067, %v1082
        %vm1085 = vcmask 130048
        %v1086 = vsel %vm1085, %v1084, 0.0
        %1087 = vadd.xlane.f32.xlu0 %v1086
        %v1088 = vpop.xlane.xlu0 %1087
        %v1089 = vmul.f32 %v916, %v1079
        %v1090 = vmul.f32 %v1089, %v1088
        %v1091 = vsub.f32 0.0, %v1090
        %v1092 = vmul.f32 %v1091, 1.442695
        %v1093 = vpow.pop %v1092
        %v1094 = vadd.f32 %v1093, 1.0
        %v1095 = vrcp.pop %v1094
        %v1096 = vmul.f32 1.0, %v1095
        %v1097 = vmul.f32 %v1090, %v1096
        %v1098 = vunpack.c.l.bf16 %v497
        %v1099 = vmul.f32 %v1097, %v1098
        %v1100 = vpack.c.bf16 %v1099, %v1099
        %v1101 = vld [vmem:[%s9] sm:$0xf]
        %v1102 = vld [vmem:[%s9 + $0x4] sm:$0xf]
        %v1103 = vld [vmem:[%s9 + $0x8] sm:$0xf]
        %v1104 = vld [vmem:[%s9 + $0xc] sm:$0xf]
        %v1105 = vld [vmem:[%s9 + $0x10] sm:$0xf]
        %v1106 = vld [vmem:[%s9 + $0x14] sm:$0xf]
        %v1107 = vld [vmem:[%s9 + $0x18] sm:$0xf]
        %v1108 = vld [vmem:[%s9 + $0x1c] sm:$0xf]
        %v1109 = vld [vmem:[%s9 + $0x20] sm:$0xf]
        %v1110 = vld [vmem:[%s9 + $0x24] sm:$0xf]
        %v1111 = vld [vmem:[%s9 + $0x28] sm:$0xf]
        %v1112 = vld [vmem:[%s9 + $0x2c] sm:$0xf]
        %v1113 = vld [vmem:[%s9 + $0x30] sm:$0xf]
        %v1114 = vld [vmem:[%s9 + $0x34] sm:$0xf]
        %v1115 = vld [vmem:[%s9 + $0x38] sm:$0xf]
        %v1116 = vld [vmem:[%s9 + $0x3c] sm:$0xf]
        %v1117 = vld [vmem:[%s10] sm:$0x1]
        %v1119 = vlaneseq
        %v1120 = vshrl.u32 %v1119, 7
        %v1121 = vsub.s32 0, %v1120
        %v1122 = vrot.slane %v1117, %v1121
        %v1140 = vunpack.c.l.b16 %v1101
        %v1141 = vunpack.c.l.b16 %v1102
        %v1142 = vunpack.c.l.b16 %v1103
        %v1143 = vunpack.c.l.b16 %v1104
        %v1144 = vunpack.c.l.b16 %v1105
        %v1145 = vunpack.c.l.b16 %v1106
        %v1146 = vunpack.c.l.b16 %v1107
        %v1147 = vunpack.c.l.b16 %v1108
        %v1148 = vunpack.c.l.b16 %v1109
        %v1149 = vunpack.c.l.b16 %v1110
        %v1150 = vunpack.c.l.b16 %v1111
        %v1151 = vunpack.c.l.b16 %v1112
        %v1152 = vunpack.c.l.b16 %v1113
        %v1153 = vunpack.c.l.b16 %v1114
        %v1154 = vunpack.c.l.b16 %v1115
        %v1155 = vunpack.c.l.b16 %v1116
        %v1156 = vpack.c.b16 %v1141, %v1140
        %v1157 = vpack.c.b16 %v1143, %v1142
        %v1158 = vpack.c.b16 %v1145, %v1144
        %v1159 = vpack.c.b16 %v1147, %v1146
        %v1160 = vpack.c.b16 %v1149, %v1148
        %v1161 = vpack.c.b16 %v1151, %v1150
        %v1162 = vpack.c.b16 %v1153, %v1152
        %v1163 = vpack.c.b16 %v1155, %v1154
        %1172 = vmatprep.subr.bf16.mxu0 0
        %1173 = vmatpush1.bf16.msra.mxu0 %v1156
        %1174 = vmatprep.subr.bf16.mxu0 0
        %1175 = vmatpush1.bf16.msra.mxu0 %v1157
        %1176 = vmatprep.subr.bf16.mxu0 0
        %1177 = vmatpush1.bf16.msra.mxu0 %v1158
        %1178 = vmatprep.subr.bf16.mxu0 0
        %1179 = vmatpush1.bf16.msra.mxu0 %v1159
        %1180 = vmatprep.subr.bf16.mxu0 0
        %1181 = vmatpush1.bf16.msra.mxu0 %v1160
        %1182 = vmatprep.subr.bf16.mxu0 0
        %1183 = vmatpush1.bf16.msra.mxu0 %v1161
        %1184 = vmatprep.subr.bf16.mxu0 0
        %1185 = vmatpush1.bf16.msra.mxu0 %v1162
        %1186 = vmatprep.subr.bf16.mxu0 0
        %1187 = vmatpush1.bf16.msra.mxu0 %v1163
        %1188 = vmatprep.subr.bf16.mxu0 0
        %1189 = vmatpush1.bf16.msra.mxu0 0
        %1190 = vmatprep.subr.bf16.mxu0 0
        %1191 = vmatpush1.bf16.msra.mxu0 0
        %1192 = vmatprep.subr.bf16.mxu0 0
        %1193 = vmatpush1.bf16.msra.mxu0 0
        %1194 = vmatprep.subr.bf16.mxu0 0
        %1195 = vmatpush1.bf16.msra.mxu0 0
        %1196 = vmatprep.subr.bf16.mxu0 0
        %1197 = vmatpush1.bf16.msra.mxu0 0
        %1198 = vmatprep.subr.bf16.mxu0 0
        %1199 = vmatpush1.bf16.msra.mxu0 0
        %1200 = vmatprep.subr.bf16.mxu0 0
        %1201 = vmatpush1.bf16.msra.mxu0 0
        %1202 = vmatprep.subr.bf16.mxu0 0
        %1203 = vmatpush1.bf16.msra.mxu0 0
        %1204 = vmatprep.mubr.bf16.mxu0 0
        %1205 = vmatmul.mubr.bf16.gmra.mrb[0].mxu0 %v1100
        %v1206 = vpop.f32.mrb[0].mxu0
        %v1207 = vadd.f32 %v1122, %v1206
        %v1208 = vpop.f32.mrb[0].mxu0
        %v1209 = vpop.f32.mrb[0].mxu0
        %v1210 = vpop.f32.mrb[0].mxu0
        %1211 = vdwg.mxu0
        %1212 = vst [vmem:[%s377] sm:$0xff] %v1207
        %s1213 = sand.u32 %s269, 1
        %s1214 = scalar_lea.sflag [#allocation3], %s1213
        %s1215 = sand.u32 %s269, 1
        %s1216 = smul.addr %s1215, 8
        %s1217 = scalar_lea.vmem [#allocation2], %s1216
        // Predicated region
        $region65: #{tpu_custom_call.1} parent=63 // pred_check
          %p1218 = pneg %p279
        $region66: #{tpu_custom_call.1} parent=63 // pred_check_branch
          %1220 = sbr.rel (%p1218) target = $region68
        $region67: #{tpu_custom_call.1} parent=63 // pred_region
          %s1222 = ssub.s32 128, 128
          %1223 = vsyncadd %s1214, %s1222
          %s1224 = smul.addr %s25, 128
          %s1225 = scalar_lea.hbm %s11, %s1224
          %s1227 = sshll.u32 %s1217, 4
          %s1228 = int_to_ptr.vmem [resolvable:$true] %s1227
          %1230 = dma.vmem_to_hbm [thread:$0]  %s1228, 128, %s1225, %s1214
        $region68: #{tpu_custom_call.1} parent=63 // pred_fallthru
          _
      $region64: #{tpu_custom_call.1} parent=5 // pred_fallthru
        _
      %p1231 = scmp.le.s32.totalorder 2, %s20
      // Predicated region
      $region69: #{tpu_custom_call.1} parent=5 // pred_check
        %p1232 = pneg %p1231
      $region70: #{tpu_custom_call.1} parent=5 // pred_check_branch
        %1234 = sbr.rel (%p1232) target = $region72
      $region71: #{tpu_custom_call.1} parent=5 // pred_region
        %s1235 = ssub.s32 %s20, 2
        // Predicated region
        $region73: #{tpu_custom_call.1} parent=71 // pred_check
          %p1236 = pneg %p285
        $region74: #{tpu_custom_call.1} parent=71 // pred_check_branch
          %1238 = sbr.rel (%p1236) target = $region76
        $region75: #{tpu_custom_call.1} parent=71 // pred_region
          %s1239 = sand.u32 %s270, 1
          %s1240 = scalar_lea.sflag [#allocation3], %s1239
          %s1241 = sand.u32 %s270, 1
          %s1242 = smul.addr %s1241, 8
          %s1243 = scalar_lea.vmem [#allocation2], %s1242
          %1244 = dma.done %s1240, 128
        $region76: #{tpu_custom_call.1} parent=71 // pred_fallthru
          _
      $region72: #{tpu_custom_call.1} parent=5 // pred_fallthru
        _
    $region6: #{tpu_custom_call.1} parent=1 // loop_footer
      %s24 = sadd.s32 1, %s20
    $region7: #{tpu_custom_call.1} parent=1 // loop_footer_branch
      %19 = sbr.rel target = $region3
    $region8: #{tpu_custom_call.1} parent=1 // loop_exit
      _
    %1245 = vsyncpa [#allocation3], 1
    %s1246 = scalar_lea.sflag [#allocation3], 1
    %1247 = vsyncpa %s1246, 1

</llo_original>
